<compile_context>
chip_gen: v7x
topology: tpu7x:2x2x1
jax: 0.10.0
libtpu: 0.0.40
codegen_flags: <defaults>
</compile_context>

<pallas_src>
import functools
import math

import jax
import jax.numpy as jnp
from jax.experimental import pallas as pl
from jax.experimental.pallas import tpu as pltpu


def _get_important_channel_num(C, lam=0.6):
    floor = math.floor(lam * C)
    return floor + floor % 2


def _ham_kernel(w_ref, tapm_ref, cmask_ref, x_ref, o_ref, *, W):
    """One grid step processes NB full (C, HW_pad) feature maps, lane-dense.

    w_ref:     (98,)          f32 SMEM (scalar prefetch) -- 7x7 conv weight [ci, ky, kx]
    tapm_ref:  (49, HW_pad)   f32 VMEM -- per-tap validity masks (image-border handling)
    cmask_ref: (NB, C, 1)     f32 VMEM -- channel keep/drop mask
    x_ref:     (NB, C, HW_pad) VMEM    -- input features (flattened spatial, lane-dense)
    o_ref:     (NB, C, HW_pad) VMEM    -- output features
    """
    NB, C, HWp = x_ref.shape

    # Masked features + channel-wise mean/max: whole-block VPU ops, no loops.
    xi = x_ref[...] * cmask_ref[...]                     # (NB, C, HWp)
    avg = jnp.mean(xi, axis=1).astype(jnp.float32)       # (NB, HWp)
    mx = jnp.max(xi, axis=1).astype(jnp.float32)         # (NB, HWp)

    # Hoist the 98 conv weights out of the tap loop (one SMEM read each per step).
    w = [w_ref[i] for i in range(98)]

    # Conv2d(2 -> 1, kernel 7, pad 3, no bias), lane-dense & batched:
    # output[p] needs input[p + dy*W + dx]; fold the two input channels first
    # (roll is linear), then one pltpu.roll per tap (XLU slot) and a precomputed
    # boundary mask that zeroes row-wrap / out-of-image contributions.
    s = jnp.zeros((NB, HWp), jnp.float32)
    for ky in range(7):
        for kx in range(7):
            i = ky * 7 + kx
            t = (ky - 3) * W + (kx - 3)                  # flat lane shift for this tap
            lin = w[i] * avg + w[49 + i] * mx            # (NB, HWp) full-width FMAs
            rolled = lin if t == 0 else pltpu.roll(lin, shift=(-t) % HWp, axis=1)
            s = s + rolled * tapm_ref[pl.ds(i, 1), :]    # (1, HWp) mask broadcast
    a = jax.nn.sigmoid(jnp.maximum(s, 0.0))              # sigmoid(relu(conv)), (NB, HWp)

    # Single wide lane-dense store; mask*x recomputed here so no block-sized
    # value stays live across the conv section.
    o_ref[...] = jnp.maximum(
        x_ref[...] * cmask_ref[...] * a[:, None, :], 0.0
    ).astype(o_ref.dtype)


def resblock_ham(x, conv_w, *, batch_tile=None):
    """HAM block forward.  x: (N, C, H, W) ; conv_w: (1, 2, 7, 7) f32."""
    N, C, H, W = x.shape
    HW = H * W
    HW_pad = ((HW + 127) // 128) * 128                   # lane-dense last dim
    C_im = _get_important_channel_num(C)
    itemsize = jnp.dtype(x.dtype).itemsize

    # Channel means + top-k keep-mask: tiny glue, left to XLA (per perf review).
    means = jnp.mean(x, axis=(2, 3))                               # (N, C)
    _, topk_idx = jax.lax.top_k(means, C_im)                       # (N, C_im)
    cmask = jnp.zeros((N, C), jnp.float32).at[
        jnp.arange(N)[:, None], topk_idx].set(1.0)                 # (N, C)

    # Lane-dense layout, padded to a multiple of 128 lanes.
    x3 = x.reshape(N, C, HW)
    if HW_pad != HW:
        x3 = jnp.pad(x3, ((0, 0), (0, 0), (0, HW_pad - HW)))

    # Per-tap validity masks for the roll-based conv (computed once, XLA side).
    p = jnp.arange(HW_pad)
    prow, pcol = p // W, p % W
    tap_masks = []
    for ky in range(7):
        for kx in range(7):
            dy, dx = ky - 3, kx - 3
            ok = ((prow + dy >= 0) & (prow + dy < H) &
                  (pcol + dx >= 0) & (pcol + dx < W) & (p < HW))
            tap_masks.append(ok)
    tap_masks = jnp.stack(tap_masks).astype(jnp.float32)           # (49, HW_pad)

    w_flat = conv_w.reshape(-1).astype(jnp.float32)                # (98,)

    # ---- batch packing sized against the per-generation VMEM capacity ----
    try:
        vmem_cap = int(getattr(pltpu.get_tpu_info(), "vmem_capacity_bytes",
                               64 * 2 ** 20))
    except Exception:
        vmem_cap = 64 * 2 ** 20                                    # conservative (v7x)
    budget = int(vmem_cap * 0.7)

    per_item_in = C * HW_pad * itemsize
    if batch_tile is None:
        nb_by_target = max(1, (2 * 2 ** 20) // per_item_in)        # ~2 MiB input block
        nb_by_vmem = max(1, (budget - 8 * 2 ** 20) // (4 * per_item_in))
        batch_tile = min(N, nb_by_target, nb_by_vmem, 256)
    NB = int(max(1, batch_tile))

    N_pad = ((N + NB - 1) // NB) * NB
    if N_pad != N:                                                 # pad batch to NB multiple
        x3 = jnp.pad(x3, ((0, N_pad - N), (0, 0), (0, 0)))
        cmask = jnp.pad(cmask, ((0, N_pad - N), (0, 0)))
    cmask3 = cmask[:, :, None]                                     # (N_pad, C, 1)

    grid = (N_pad // NB,)
    block_bytes = NB * C * HW_pad * itemsize
    vmem_limit = int(min(max(vmem_cap - 8 * 2 ** 20, 32 * 2 ** 20),
                         max(32 * 2 ** 20, 4 * block_bytes + 16 * 2 ** 20)))

    cost = pl.CostEstimate(
        flops=(5 * C + 49 * 5) * N_pad * HW_pad,
        transcendentals=N_pad * HW_pad,
        bytes_accessed=(2 * N_pad * C * HW_pad + N_pad * C + 49 * HW_pad + 98) * itemsize,
    )

    out3 = pl.pallas_call(
        functools.partial(_ham_kernel, W=W),
        out_shape=jax.ShapeDtypeStruct((N_pad, C, HW_pad), x.dtype),
        grid_spec=pltpu.PrefetchScalarGridSpec(
            num_scalar_prefetch=1,
            grid=grid,
            in_specs=[
                pl.BlockSpec((49, HW_pad), lambda n, *_: (0, 0)),       # tap masks (resident)
                pl.BlockSpec((NB, C, 1), lambda n, *_: (n, 0, 0)),      # channel mask
                pl.BlockSpec((NB, C, HW_pad), lambda n, *_: (n, 0, 0)),  # x
            ],
            out_specs=pl.BlockSpec((NB, C, HW_pad), lambda n, *_: (n, 0, 0)),
        ),
        compiler_params=pltpu.CompilerParams(
            dimension_semantics=("parallel",),   # batch grid steps fully independent
            vmem_limit_bytes=vmem_limit,
        ),
        cost_estimate=cost,
    )(w_flat, tap_masks, cmask3, x3)

    out3 = out3[:N, :, :HW]
    return out3.reshape(N, C, H, W)


# ----------------------------- pure-JAX reference -----------------------------
def ref_resblock_ham(x, conv_w):
    N, C, H, W = x.shape
    C_im = _get_important_channel_num(C)
    M = jnp.mean(x, axis=(2, 3))                                   # (N, C)
    _, idx = jax.lax.top_k(M, C_im)
    mask = jnp.zeros((N, C), jnp.float32).at[
        jnp.arange(N)[:, None], idx].set(1.0)
    xi = x * mask[:, :, None, None]
    avg = jnp.mean(xi, axis=1, keepdims=True)
    mx = jnp.max(xi, axis=1, keepdims=True)
    inp = jnp.concatenate([avg, mx], axis=1)                       # (N, 2, H, W)
    s = jax.lax.conv_general_dilated(
        inp, conv_w, window_strides=(1, 1), padding=[(3, 3), (3, 3)],
        dimension_numbers=("NCHW", "OIHW", "NCHW"))
    a = jax.nn.sigmoid(jnp.maximum(s, 0.0))
    return jnp.maximum(xi * a, 0.0)


if __name__ == "__main__":
    key = jax.random.PRNGKey(0)
    kx_key, kw_key = jax.random.split(key)
    N, C, H, W = 2, 8, 16, 16

    x = jax.random.normal(kx_key, (N, C, H, W), dtype=jnp.float32)
    # deterministic Conv2d(2, 1, 7, bias=False) weight (kaiming-uniform-like bound)
    bound = 1.0 / math.sqrt(2 * 7 * 7)
    conv_w = jax.random.uniform(kw_key, (1, 2, 7, 7), jnp.float32, -bound, bound)

    out = jax.block_until_ready(resblock_ham(x, conv_w))
    ref = ref_resblock_ham(x, conv_w)

    assert out.shape == (N, C, H, W)
    max_err = float(jnp.max(jnp.abs(out - ref)))
    assert max_err < 1e-4, f"max_abs_err={max_err}"
    print("KERNEL_OK")
</pallas_src>

<mosaic_0001>
module attributes {stable_mosaic.version = 11 : i64} {
  func.func @_ham_kernel(%arg0: i32, %arg1: memref<98xf32, #tpu.memory_space<smem>>, %arg2: memref<49x256xf32, #tpu.memory_space<vmem>>, %arg3: memref<2x8x1xf32, #tpu.memory_space<vmem>>, %arg4: memref<2x8x256xf32, #tpu.memory_space<vmem>>, %arg5: memref<2x8x256xf32, #tpu.memory_space<vmem>>) attributes {dimension_semantics = [#tpu.dimension_semantics<parallel>], iteration_bounds = array<i64: 1>, scalar_prefetch = 1 : i64, scratch_operands = 0 : i64, tpu.core_type = #tpu.core_type<tc>, window_params = [{pipeline_mode = #tpu.pipeline_mode<synchronous>, transform_indices = @transform_0, window_bounds = array<i64: 49, 256>}, {transform_indices = @transform_1, window_bounds = array<i64: 2, 8, 1>}, {transform_indices = @transform_2, window_bounds = array<i64: 2, 8, 256>}, {transform_indices = @transform_3, window_bounds = array<i64: 2, 8, 256>}]} {
    %c0 = arith.constant 0 : index
    %c0_0 = arith.constant 0 : index
    %c0_1 = arith.constant 0 : index
    %0 = vector.load %arg4[%c0, %c0_0, %c0_1] : memref<2x8x256xf32, #tpu.memory_space<vmem>>, vector<2x8x256xf32>
    %c0_2 = arith.constant 0 : index
    %c0_3 = arith.constant 0 : index
    %c0_4 = arith.constant 0 : index
    %1 = vector.load %arg3[%c0_2, %c0_3, %c0_4] : memref<2x8x1xf32, #tpu.memory_space<vmem>>, vector<2x8x1xf32>
    %2 = vector.broadcast %1 : vector<2x8x1xf32> to vector<2x8x256xf32>
    %3 = arith.mulf %0, %2 : vector<2x8x256xf32>
    %cst = arith.constant dense<0.000000e+00> : vector<2x256xf32>
    %4 = vector.multi_reduction <add>, %3, %cst [1] : vector<2x8x256xf32> to vector<2x256xf32>
    %cst_5 = arith.constant 8.000000e+00 : f32
    %5 = vector.broadcast %cst_5 : f32 to vector<2x256xf32>
    %6 = arith.divf %4, %5 : vector<2x256xf32>
    %cst_6 = arith.constant dense<0xFF800000> : vector<2x256xf32>
    %7 = vector.multi_reduction <maximumf>, %3, %cst_6 [1] : vector<2x8x256xf32> to vector<2x256xf32>
    %c0_7 = arith.constant 0 : index
    %8 = memref.load %arg1[%c0_7] : memref<98xf32, #tpu.memory_space<smem>>
    %c1 = arith.constant 1 : index
    %9 = memref.load %arg1[%c1] : memref<98xf32, #tpu.memory_space<smem>>
    %c2 = arith.constant 2 : index
    %10 = memref.load %arg1[%c2] : memref<98xf32, #tpu.memory_space<smem>>
    %c3 = arith.constant 3 : index
    %11 = memref.load %arg1[%c3] : memref<98xf32, #tpu.memory_space<smem>>
    %c4 = arith.constant 4 : index
    %12 = memref.load %arg1[%c4] : memref<98xf32, #tpu.memory_space<smem>>
    %c5 = arith.constant 5 : index
    %13 = memref.load %arg1[%c5] : memref<98xf32, #tpu.memory_space<smem>>
    %c6 = arith.constant 6 : index
    %14 = memref.load %arg1[%c6] : memref<98xf32, #tpu.memory_space<smem>>
    %c7 = arith.constant 7 : index
    %15 = memref.load %arg1[%c7] : memref<98xf32, #tpu.memory_space<smem>>
    %c8 = arith.constant 8 : index
    %16 = memref.load %arg1[%c8] : memref<98xf32, #tpu.memory_space<smem>>
    %c9 = arith.constant 9 : index
    %17 = memref.load %arg1[%c9] : memref<98xf32, #tpu.memory_space<smem>>
    %c10 = arith.constant 10 : index
    %18 = memref.load %arg1[%c10] : memref<98xf32, #tpu.memory_space<smem>>
    %c11 = arith.constant 11 : index
    %19 = memref.load %arg1[%c11] : memref<98xf32, #tpu.memory_space<smem>>
    %c12 = arith.constant 12 : index
    %20 = memref.load %arg1[%c12] : memref<98xf32, #tpu.memory_space<smem>>
    %c13 = arith.constant 13 : index
    %21 = memref.load %arg1[%c13] : memref<98xf32, #tpu.memory_space<smem>>
    %c14 = arith.constant 14 : index
    %22 = memref.load %arg1[%c14] : memref<98xf32, #tpu.memory_space<smem>>
    %c15 = arith.constant 15 : index
    %23 = memref.load %arg1[%c15] : memref<98xf32, #tpu.memory_space<smem>>
    %c16 = arith.constant 16 : index
    %24 = memref.load %arg1[%c16] : memref<98xf32, #tpu.memory_space<smem>>
    %c17 = arith.constant 17 : index
    %25 = memref.load %arg1[%c17] : memref<98xf32, #tpu.memory_space<smem>>
    %c18 = arith.constant 18 : index
    %26 = memref.load %arg1[%c18] : memref<98xf32, #tpu.memory_space<smem>>
    %c19 = arith.constant 19 : index
    %27 = memref.load %arg1[%c19] : memref<98xf32, #tpu.memory_space<smem>>
    %c20 = arith.constant 20 : index
    %28 = memref.load %arg1[%c20] : memref<98xf32, #tpu.memory_space<smem>>
    %c21 = arith.constant 21 : index
    %29 = memref.load %arg1[%c21] : memref<98xf32, #tpu.memory_space<smem>>
    %c22 = arith.constant 22 : index
    %30 = memref.load %arg1[%c22] : memref<98xf32, #tpu.memory_space<smem>>
    %c23 = arith.constant 23 : index
    %31 = memref.load %arg1[%c23] : memref<98xf32, #tpu.memory_space<smem>>
    %c24 = arith.constant 24 : index
    %32 = memref.load %arg1[%c24] : memref<98xf32, #tpu.memory_space<smem>>
    %c25 = arith.constant 25 : index
    %33 = memref.load %arg1[%c25] : memref<98xf32, #tpu.memory_space<smem>>
    %c26 = arith.constant 26 : index
    %34 = memref.load %arg1[%c26] : memref<98xf32, #tpu.memory_space<smem>>
    %c27 = arith.constant 27 : index
    %35 = memref.load %arg1[%c27] : memref<98xf32, #tpu.memory_space<smem>>
    %c28 = arith.constant 28 : index
    %36 = memref.load %arg1[%c28] : memref<98xf32, #tpu.memory_space<smem>>
    %c29 = arith.constant 29 : index
    %37 = memref.load %arg1[%c29] : memref<98xf32, #tpu.memory_space<smem>>
    %c30 = arith.constant 30 : index
    %38 = memref.load %arg1[%c30] : memref<98xf32, #tpu.memory_space<smem>>
    %c31 = arith.constant 31 : index
    %39 = memref.load %arg1[%c31] : memref<98xf32, #tpu.memory_space<smem>>
    %c32 = arith.constant 32 : index
    %40 = memref.load %arg1[%c32] : memref<98xf32, #tpu.memory_space<smem>>
    %c33 = arith.constant 33 : index
    %41 = memref.load %arg1[%c33] : memref<98xf32, #tpu.memory_space<smem>>
    %c34 = arith.constant 34 : index
    %42 = memref.load %arg1[%c34] : memref<98xf32, #tpu.memory_space<smem>>
    %c35 = arith.constant 35 : index
    %43 = memref.load %arg1[%c35] : memref<98xf32, #tpu.memory_space<smem>>
    %c36 = arith.constant 36 : index
    %44 = memref.load %arg1[%c36] : memref<98xf32, #tpu.memory_space<smem>>
    %c37 = arith.constant 37 : index
    %45 = memref.load %arg1[%c37] : memref<98xf32, #tpu.memory_space<smem>>
    %c38 = arith.constant 38 : index
    %46 = memref.load %arg1[%c38] : memref<98xf32, #tpu.memory_space<smem>>
    %c39 = arith.constant 39 : index
    %47 = memref.load %arg1[%c39] : memref<98xf32, #tpu.memory_space<smem>>
    %c40 = arith.constant 40 : index
    %48 = memref.load %arg1[%c40] : memref<98xf32, #tpu.memory_space<smem>>
    %c41 = arith.constant 41 : index
    %49 = memref.load %arg1[%c41] : memref<98xf32, #tpu.memory_space<smem>>
    %c42 = arith.constant 42 : index
    %50 = memref.load %arg1[%c42] : memref<98xf32, #tpu.memory_space<smem>>
    %c43 = arith.constant 43 : index
    %51 = memref.load %arg1[%c43] : memref<98xf32, #tpu.memory_space<smem>>
    %c44 = arith.constant 44 : index
    %52 = memref.load %arg1[%c44] : memref<98xf32, #tpu.memory_space<smem>>
    %c45 = arith.constant 45 : index
    %53 = memref.load %arg1[%c45] : memref<98xf32, #tpu.memory_space<smem>>
    %c46 = arith.constant 46 : index
    %54 = memref.load %arg1[%c46] : memref<98xf32, #tpu.memory_space<smem>>
    %c47 = arith.constant 47 : index
    %55 = memref.load %arg1[%c47] : memref<98xf32, #tpu.memory_space<smem>>
    %c48 = arith.constant 48 : index
    %56 = memref.load %arg1[%c48] : memref<98xf32, #tpu.memory_space<smem>>
    %c49 = arith.constant 49 : index
    %57 = memref.load %arg1[%c49] : memref<98xf32, #tpu.memory_space<smem>>
    %c50 = arith.constant 50 : index
    %58 = memref.load %arg1[%c50] : memref<98xf32, #tpu.memory_space<smem>>
    %c51 = arith.constant 51 : index
    %59 = memref.load %arg1[%c51] : memref<98xf32, #tpu.memory_space<smem>>
    %c52 = arith.constant 52 : index
    %60 = memref.load %arg1[%c52] : memref<98xf32, #tpu.memory_space<smem>>
    %c53 = arith.constant 53 : index
    %61 = memref.load %arg1[%c53] : memref<98xf32, #tpu.memory_space<smem>>
    %c54 = arith.constant 54 : index
    %62 = memref.load %arg1[%c54] : memref<98xf32, #tpu.memory_space<smem>>
    %c55 = arith.constant 55 : index
    %63 = memref.load %arg1[%c55] : memref<98xf32, #tpu.memory_space<smem>>
    %c56 = arith.constant 56 : index
    %64 = memref.load %arg1[%c56] : memref<98xf32, #tpu.memory_space<smem>>
    %c57 = arith.constant 57 : index
    %65 = memref.load %arg1[%c57] : memref<98xf32, #tpu.memory_space<smem>>
    %c58 = arith.constant 58 : index
    %66 = memref.load %arg1[%c58] : memref<98xf32, #tpu.memory_space<smem>>
    %c59 = arith.constant 59 : index
    %67 = memref.load %arg1[%c59] : memref<98xf32, #tpu.memory_space<smem>>
    %c60 = arith.constant 60 : index
    %68 = memref.load %arg1[%c60] : memref<98xf32, #tpu.memory_space<smem>>
    %c61 = arith.constant 61 : index
    %69 = memref.load %arg1[%c61] : memref<98xf32, #tpu.memory_space<smem>>
    %c62 = arith.constant 62 : index
    %70 = memref.load %arg1[%c62] : memref<98xf32, #tpu.memory_space<smem>>
    %c63 = arith.constant 63 : index
    %71 = memref.load %arg1[%c63] : memref<98xf32, #tpu.memory_space<smem>>
    %c64 = arith.constant 64 : index
    %72 = memref.load %arg1[%c64] : memref<98xf32, #tpu.memory_space<smem>>
    %c65 = arith.constant 65 : index
    %73 = memref.load %arg1[%c65] : memref<98xf32, #tpu.memory_space<smem>>
    %c66 = arith.constant 66 : index
    %74 = memref.load %arg1[%c66] : memref<98xf32, #tpu.memory_space<smem>>
    %c67 = arith.constant 67 : index
    %75 = memref.load %arg1[%c67] : memref<98xf32, #tpu.memory_space<smem>>
    %c68 = arith.constant 68 : index
    %76 = memref.load %arg1[%c68] : memref<98xf32, #tpu.memory_space<smem>>
    %c69 = arith.constant 69 : index
    %77 = memref.load %arg1[%c69] : memref<98xf32, #tpu.memory_space<smem>>
    %c70 = arith.constant 70 : index
    %78 = memref.load %arg1[%c70] : memref<98xf32, #tpu.memory_space<smem>>
    %c71 = arith.constant 71 : index
    %79 = memref.load %arg1[%c71] : memref<98xf32, #tpu.memory_space<smem>>
    %c72 = arith.constant 72 : index
    %80 = memref.load %arg1[%c72] : memref<98xf32, #tpu.memory_space<smem>>
    %c73 = arith.constant 73 : index
    %81 = memref.load %arg1[%c73] : memref<98xf32, #tpu.memory_space<smem>>
    %c74 = arith.constant 74 : index
    %82 = memref.load %arg1[%c74] : memref<98xf32, #tpu.memory_space<smem>>
    %c75 = arith.constant 75 : index
    %83 = memref.load %arg1[%c75] : memref<98xf32, #tpu.memory_space<smem>>
    %c76 = arith.constant 76 : index
    %84 = memref.load %arg1[%c76] : memref<98xf32, #tpu.memory_space<smem>>
    %c77 = arith.constant 77 : index
    %85 = memref.load %arg1[%c77] : memref<98xf32, #tpu.memory_space<smem>>
    %c78 = arith.constant 78 : index
    %86 = memref.load %arg1[%c78] : memref<98xf32, #tpu.memory_space<smem>>
    %c79 = arith.constant 79 : index
    %87 = memref.load %arg1[%c79] : memref<98xf32, #tpu.memory_space<smem>>
    %c80 = arith.constant 80 : index
    %88 = memref.load %arg1[%c80] : memref<98xf32, #tpu.memory_space<smem>>
    %c81 = arith.constant 81 : index
    %89 = memref.load %arg1[%c81] : memref<98xf32, #tpu.memory_space<smem>>
    %c82 = arith.constant 82 : index
    %90 = memref.load %arg1[%c82] : memref<98xf32, #tpu.memory_space<smem>>
    %c83 = arith.constant 83 : index
    %91 = memref.load %arg1[%c83] : memref<98xf32, #tpu.memory_space<smem>>
    %c84 = arith.constant 84 : index
    %92 = memref.load %arg1[%c84] : memref<98xf32, #tpu.memory_space<smem>>
    %c85 = arith.constant 85 : index
    %93 = memref.load %arg1[%c85] : memref<98xf32, #tpu.memory_space<smem>>
    %c86 = arith.constant 86 : index
    %94 = memref.load %arg1[%c86] : memref<98xf32, #tpu.memory_space<smem>>
    %c87 = arith.constant 87 : index
    %95 = memref.load %arg1[%c87] : memref<98xf32, #tpu.memory_space<smem>>
    %c88 = arith.constant 88 : index
    %96 = memref.load %arg1[%c88] : memref<98xf32, #tpu.memory_space<smem>>
    %c89 = arith.constant 89 : index
    %97 = memref.load %arg1[%c89] : memref<98xf32, #tpu.memory_space<smem>>
    %c90 = arith.constant 90 : index
    %98 = memref.load %arg1[%c90] : memref<98xf32, #tpu.memory_space<smem>>
    %c91 = arith.constant 91 : index
    %99 = memref.load %arg1[%c91] : memref<98xf32, #tpu.memory_space<smem>>
    %c92 = arith.constant 92 : index
    %100 = memref.load %arg1[%c92] : memref<98xf32, #tpu.memory_space<smem>>
    %c93 = arith.constant 93 : index
    %101 = memref.load %arg1[%c93] : memref<98xf32, #tpu.memory_space<smem>>
    %c94 = arith.constant 94 : index
    %102 = memref.load %arg1[%c94] : memref<98xf32, #tpu.memory_space<smem>>
    %c95 = arith.constant 95 : index
    %103 = memref.load %arg1[%c95] : memref<98xf32, #tpu.memory_space<smem>>
    %c96 = arith.constant 96 : index
    %104 = memref.load %arg1[%c96] : memref<98xf32, #tpu.memory_space<smem>>
    %c97 = arith.constant 97 : index
    %105 = memref.load %arg1[%c97] : memref<98xf32, #tpu.memory_space<smem>>
    %cst_8 = arith.constant 0.000000e+00 : f32
    %106 = vector.broadcast %cst_8 : f32 to vector<2x256xf32>
    %107 = vector.broadcast %8 : f32 to vector<2x256xf32>
    %108 = arith.mulf %107, %6 : vector<2x256xf32>
    %109 = vector.broadcast %57 : f32 to vector<2x256xf32>
    %110 = arith.mulf %109, %7 : vector<2x256xf32>
    %111 = arith.addf %108, %110 : vector<2x256xf32>
    %c51_i32 = arith.constant 51 : i32
    %112 = tpu.dynamic_rotate %111 by %c51_i32 dim 1 : vector<2x256xf32>, i32 -> vector<2x256xf32>
    %c0_9 = arith.constant 0 : index
    %c0_10 = arith.constant 0 : index
    %113 = vector.load %arg2[%c0_9, %c0_10] : memref<49x256xf32, #tpu.memory_space<vmem>>, vector<1x256xf32>
    %114 = vector.broadcast %113 : vector<1x256xf32> to vector<2x256xf32>
    %115 = arith.mulf %112, %114 : vector<2x256xf32>
    %116 = arith.addf %106, %115 : vector<2x256xf32>
    %117 = vector.broadcast %9 : f32 to vector<2x256xf32>
    %118 = arith.mulf %117, %6 : vector<2x256xf32>
    %119 = vector.broadcast %58 : f32 to vector<2x256xf32>
    %120 = arith.mulf %119, %7 : vector<2x256xf32>
    %121 = arith.addf %118, %120 : vector<2x256xf32>
    %c50_i32 = arith.constant 50 : i32
    %122 = tpu.dynamic_rotate %121 by %c50_i32 dim 1 : vector<2x256xf32>, i32 -> vector<2x256xf32>
    %c1_11 = arith.constant 1 : index
    %c0_12 = arith.constant 0 : index
    %123 = vector.load %arg2[%c1_11, %c0_12] : memref<49x256xf32, #tpu.memory_space<vmem>>, vector<1x256xf32>
    %124 = vector.broadcast %123 : vector<1x256xf32> to vector<2x256xf32>
    %125 = arith.mulf %122, %124 : vector<2x256xf32>
    %126 = arith.addf %116, %125 : vector<2x256xf32>
    %127 = vector.broadcast %10 : f32 to vector<2x256xf32>
    %128 = arith.mulf %127, %6 : vector<2x256xf32>
    %129 = vector.broadcast %59 : f32 to vector<2x256xf32>
    %130 = arith.mulf %129, %7 : vector<2x256xf32>
    %131 = arith.addf %128, %130 : vector<2x256xf32>
    %c49_i32 = arith.constant 49 : i32
    %132 = tpu.dynamic_rotate %131 by %c49_i32 dim 1 : vector<2x256xf32>, i32 -> vector<2x256xf32>
    %c2_13 = arith.constant 2 : index
    %c0_14 = arith.constant 0 : index
    %133 = vector.load %arg2[%c2_13, %c0_14] : memref<49x256xf32, #tpu.memory_space<vmem>>, vector<1x256xf32>
    %134 = vector.broadcast %133 : vector<1x256xf32> to vector<2x256xf32>
    %135 = arith.mulf %132, %134 : vector<2x256xf32>
    %136 = arith.addf %126, %135 : vector<2x256xf32>
    %137 = vector.broadcast %11 : f32 to vector<2x256xf32>
    %138 = arith.mulf %137, %6 : vector<2x256xf32>
    %139 = vector.broadcast %60 : f32 to vector<2x256xf32>
    %140 = arith.mulf %139, %7 : vector<2x256xf32>
    %141 = arith.addf %138, %140 : vector<2x256xf32>
    %c48_i32 = arith.constant 48 : i32
    %142 = tpu.dynamic_rotate %141 by %c48_i32 dim 1 : vector<2x256xf32>, i32 -> vector<2x256xf32>
    %c3_15 = arith.constant 3 : index
    %c0_16 = arith.constant 0 : index
    %143 = vector.load %arg2[%c3_15, %c0_16] : memref<49x256xf32, #tpu.memory_space<vmem>>, vector<1x256xf32>
    %144 = vector.broadcast %143 : vector<1x256xf32> to vector<2x256xf32>
    %145 = arith.mulf %142, %144 : vector<2x256xf32>
    %146 = arith.addf %136, %145 : vector<2x256xf32>
    %147 = vector.broadcast %12 : f32 to vector<2x256xf32>
    %148 = arith.mulf %147, %6 : vector<2x256xf32>
    %149 = vector.broadcast %61 : f32 to vector<2x256xf32>
    %150 = arith.mulf %149, %7 : vector<2x256xf32>
    %151 = arith.addf %148, %150 : vector<2x256xf32>
    %c47_i32 = arith.constant 47 : i32
    %152 = tpu.dynamic_rotate %151 by %c47_i32 dim 1 : vector<2x256xf32>, i32 -> vector<2x256xf32>
    %c4_17 = arith.constant 4 : index
    %c0_18 = arith.constant 0 : index
    %153 = vector.load %arg2[%c4_17, %c0_18] : memref<49x256xf32, #tpu.memory_space<vmem>>, vector<1x256xf32>
    %154 = vector.broadcast %153 : vector<1x256xf32> to vector<2x256xf32>
    %155 = arith.mulf %152, %154 : vector<2x256xf32>
    %156 = arith.addf %146, %155 : vector<2x256xf32>
    %157 = vector.broadcast %13 : f32 to vector<2x256xf32>
    %158 = arith.mulf %157, %6 : vector<2x256xf32>
    %159 = vector.broadcast %62 : f32 to vector<2x256xf32>
    %160 = arith.mulf %159, %7 : vector<2x256xf32>
    %161 = arith.addf %158, %160 : vector<2x256xf32>
    %c46_i32 = arith.constant 46 : i32
    %162 = tpu.dynamic_rotate %161 by %c46_i32 dim 1 : vector<2x256xf32>, i32 -> vector<2x256xf32>
    %c5_19 = arith.constant 5 : index
    %c0_20 = arith.constant 0 : index
    %163 = vector.load %arg2[%c5_19, %c0_20] : memref<49x256xf32, #tpu.memory_space<vmem>>, vector<1x256xf32>
    %164 = vector.broadcast %163 : vector<1x256xf32> to vector<2x256xf32>
    %165 = arith.mulf %162, %164 : vector<2x256xf32>
    %166 = arith.addf %156, %165 : vector<2x256xf32>
    %167 = vector.broadcast %14 : f32 to vector<2x256xf32>
    %168 = arith.mulf %167, %6 : vector<2x256xf32>
    %169 = vector.broadcast %63 : f32 to vector<2x256xf32>
    %170 = arith.mulf %169, %7 : vector<2x256xf32>
    %171 = arith.addf %168, %170 : vector<2x256xf32>
    %c45_i32 = arith.constant 45 : i32
    %172 = tpu.dynamic_rotate %171 by %c45_i32 dim 1 : vector<2x256xf32>, i32 -> vector<2x256xf32>
    %c6_21 = arith.constant 6 : index
    %c0_22 = arith.constant 0 : index
    %173 = vector.load %arg2[%c6_21, %c0_22] : memref<49x256xf32, #tpu.memory_space<vmem>>, vector<1x256xf32>
    %174 = vector.broadcast %173 : vector<1x256xf32> to vector<2x256xf32>
    %175 = arith.mulf %172, %174 : vector<2x256xf32>
    %176 = arith.addf %166, %175 : vector<2x256xf32>
    %177 = vector.broadcast %15 : f32 to vector<2x256xf32>
    %178 = arith.mulf %177, %6 : vector<2x256xf32>
    %179 = vector.broadcast %64 : f32 to vector<2x256xf32>
    %180 = arith.mulf %179, %7 : vector<2x256xf32>
    %181 = arith.addf %178, %180 : vector<2x256xf32>
    %c35_i32 = arith.constant 35 : i32
    %182 = tpu.dynamic_rotate %181 by %c35_i32 dim 1 : vector<2x256xf32>, i32 -> vector<2x256xf32>
    %c7_23 = arith.constant 7 : index
    %c0_24 = arith.constant 0 : index
    %183 = vector.load %arg2[%c7_23, %c0_24] : memref<49x256xf32, #tpu.memory_space<vmem>>, vector<1x256xf32>
    %184 = vector.broadcast %183 : vector<1x256xf32> to vector<2x256xf32>
    %185 = arith.mulf %182, %184 : vector<2x256xf32>
    %186 = arith.addf %176, %185 : vector<2x256xf32>
    %187 = vector.broadcast %16 : f32 to vector<2x256xf32>
    %188 = arith.mulf %187, %6 : vector<2x256xf32>
    %189 = vector.broadcast %65 : f32 to vector<2x256xf32>
    %190 = arith.mulf %189, %7 : vector<2x256xf32>
    %191 = arith.addf %188, %190 : vector<2x256xf32>
    %c34_i32 = arith.constant 34 : i32
    %192 = tpu.dynamic_rotate %191 by %c34_i32 dim 1 : vector<2x256xf32>, i32 -> vector<2x256xf32>
    %c8_25 = arith.constant 8 : index
    %c0_26 = arith.constant 0 : index
    %193 = vector.load %arg2[%c8_25, %c0_26] : memref<49x256xf32, #tpu.memory_space<vmem>>, vector<1x256xf32>
    %194 = vector.broadcast %193 : vector<1x256xf32> to vector<2x256xf32>
    %195 = arith.mulf %192, %194 : vector<2x256xf32>
    %196 = arith.addf %186, %195 : vector<2x256xf32>
    %197 = vector.broadcast %17 : f32 to vector<2x256xf32>
    %198 = arith.mulf %197, %6 : vector<2x256xf32>
    %199 = vector.broadcast %66 : f32 to vector<2x256xf32>
    %200 = arith.mulf %199, %7 : vector<2x256xf32>
    %201 = arith.addf %198, %200 : vector<2x256xf32>
    %c33_i32 = arith.constant 33 : i32
    %202 = tpu.dynamic_rotate %201 by %c33_i32 dim 1 : vector<2x256xf32>, i32 -> vector<2x256xf32>
    %c9_27 = arith.constant 9 : index
    %c0_28 = arith.constant 0 : index
    %203 = vector.load %arg2[%c9_27, %c0_28] : memref<49x256xf32, #tpu.memory_space<vmem>>, vector<1x256xf32>
    %204 = vector.broadcast %203 : vector<1x256xf32> to vector<2x256xf32>
    %205 = arith.mulf %202, %204 : vector<2x256xf32>
    %206 = arith.addf %196, %205 : vector<2x256xf32>
    %207 = vector.broadcast %18 : f32 to vector<2x256xf32>
    %208 = arith.mulf %207, %6 : vector<2x256xf32>
    %209 = vector.broadcast %67 : f32 to vector<2x256xf32>
    %210 = arith.mulf %209, %7 : vector<2x256xf32>
    %211 = arith.addf %208, %210 : vector<2x256xf32>
    %c32_i32 = arith.constant 32 : i32
    %212 = tpu.dynamic_rotate %211 by %c32_i32 dim 1 : vector<2x256xf32>, i32 -> vector<2x256xf32>
    %c10_29 = arith.constant 10 : index
    %c0_30 = arith.constant 0 : index
    %213 = vector.load %arg2[%c10_29, %c0_30] : memref<49x256xf32, #tpu.memory_space<vmem>>, vector<1x256xf32>
    %214 = vector.broadcast %213 : vector<1x256xf32> to vector<2x256xf32>
    %215 = arith.mulf %212, %214 : vector<2x256xf32>
    %216 = arith.addf %206, %215 : vector<2x256xf32>
    %217 = vector.broadcast %19 : f32 to vector<2x256xf32>
    %218 = arith.mulf %217, %6 : vector<2x256xf32>
    %219 = vector.broadcast %68 : f32 to vector<2x256xf32>
    %220 = arith.mulf %219, %7 : vector<2x256xf32>
    %221 = arith.addf %218, %220 : vector<2x256xf32>
    %c31_i32 = arith.constant 31 : i32
    %222 = tpu.dynamic_rotate %221 by %c31_i32 dim 1 : vector<2x256xf32>, i32 -> vector<2x256xf32>
    %c11_31 = arith.constant 11 : index
    %c0_32 = arith.constant 0 : index
    %223 = vector.load %arg2[%c11_31, %c0_32] : memref<49x256xf32, #tpu.memory_space<vmem>>, vector<1x256xf32>
    %224 = vector.broadcast %223 : vector<1x256xf32> to vector<2x256xf32>
    %225 = arith.mulf %222, %224 : vector<2x256xf32>
    %226 = arith.addf %216, %225 : vector<2x256xf32>
    %227 = vector.broadcast %20 : f32 to vector<2x256xf32>
    %228 = arith.mulf %227, %6 : vector<2x256xf32>
    %229 = vector.broadcast %69 : f32 to vector<2x256xf32>
    %230 = arith.mulf %229, %7 : vector<2x256xf32>
    %231 = arith.addf %228, %230 : vector<2x256xf32>
    %c30_i32 = arith.constant 30 : i32
    %232 = tpu.dynamic_rotate %231 by %c30_i32 dim 1 : vector<2x256xf32>, i32 -> vector<2x256xf32>
    %c12_33 = arith.constant 12 : index
    %c0_34 = arith.constant 0 : index
    %233 = vector.load %arg2[%c12_33, %c0_34] : memref<49x256xf32, #tpu.memory_space<vmem>>, vector<1x256xf32>
    %234 = vector.broadcast %233 : vector<1x256xf32> to vector<2x256xf32>
    %235 = arith.mulf %232, %234 : vector<2x256xf32>
    %236 = arith.addf %226, %235 : vector<2x256xf32>
    %237 = vector.broadcast %21 : f32 to vector<2x256xf32>
    %238 = arith.mulf %237, %6 : vector<2x256xf32>
    %239 = vector.broadcast %70 : f32 to vector<2x256xf32>
    %240 = arith.mulf %239, %7 : vector<2x256xf32>
    %241 = arith.addf %238, %240 : vector<2x256xf32>
    %c29_i32 = arith.constant 29 : i32
    %242 = tpu.dynamic_rotate %241 by %c29_i32 dim 1 : vector<2x256xf32>, i32 -> vector<2x256xf32>
    %c13_35 = arith.constant 13 : index
    %c0_36 = arith.constant 0 : index
    %243 = vector.load %arg2[%c13_35, %c0_36] : memref<49x256xf32, #tpu.memory_space<vmem>>, vector<1x256xf32>
    %244 = vector.broadcast %243 : vector<1x256xf32> to vector<2x256xf32>
    %245 = arith.mulf %242, %244 : vector<2x256xf32>
    %246 = arith.addf %236, %245 : vector<2x256xf32>
    %247 = vector.broadcast %22 : f32 to vector<2x256xf32>
    %248 = arith.mulf %247, %6 : vector<2x256xf32>
    %249 = vector.broadcast %71 : f32 to vector<2x256xf32>
    %250 = arith.mulf %249, %7 : vector<2x256xf32>
    %251 = arith.addf %248, %250 : vector<2x256xf32>
    %c19_i32 = arith.constant 19 : i32
    %252 = tpu.dynamic_rotate %251 by %c19_i32 dim 1 : vector<2x256xf32>, i32 -> vector<2x256xf32>
    %c14_37 = arith.constant 14 : index
    %c0_38 = arith.constant 0 : index
    %253 = vector.load %arg2[%c14_37, %c0_38] : memref<49x256xf32, #tpu.memory_space<vmem>>, vector<1x256xf32>
    %254 = vector.broadcast %253 : vector<1x256xf32> to vector<2x256xf32>
    %255 = arith.mulf %252, %254 : vector<2x256xf32>
    %256 = arith.addf %246, %255 : vector<2x256xf32>
    %257 = vector.broadcast %23 : f32 to vector<2x256xf32>
    %258 = arith.mulf %257, %6 : vector<2x256xf32>
    %259 = vector.broadcast %72 : f32 to vector<2x256xf32>
    %260 = arith.mulf %259, %7 : vector<2x256xf32>
    %261 = arith.addf %258, %260 : vector<2x256xf32>
    %c18_i32 = arith.constant 18 : i32
    %262 = tpu.dynamic_rotate %261 by %c18_i32 dim 1 : vector<2x256xf32>, i32 -> vector<2x256xf32>
    %c15_39 = arith.constant 15 : index
    %c0_40 = arith.constant 0 : index
    %263 = vector.load %arg2[%c15_39, %c0_40] : memref<49x256xf32, #tpu.memory_space<vmem>>, vector<1x256xf32>
    %264 = vector.broadcast %263 : vector<1x256xf32> to vector<2x256xf32>
    %265 = arith.mulf %262, %264 : vector<2x256xf32>
    %266 = arith.addf %256, %265 : vector<2x256xf32>
    %267 = vector.broadcast %24 : f32 to vector<2x256xf32>
    %268 = arith.mulf %267, %6 : vector<2x256xf32>
    %269 = vector.broadcast %73 : f32 to vector<2x256xf32>
    %270 = arith.mulf %269, %7 : vector<2x256xf32>
    %271 = arith.addf %268, %270 : vector<2x256xf32>
    %c17_i32 = arith.constant 17 : i32
    %272 = tpu.dynamic_rotate %271 by %c17_i32 dim 1 : vector<2x256xf32>, i32 -> vector<2x256xf32>
    %c16_41 = arith.constant 16 : index
    %c0_42 = arith.constant 0 : index
    %273 = vector.load %arg2[%c16_41, %c0_42] : memref<49x256xf32, #tpu.memory_space<vmem>>, vector<1x256xf32>
    %274 = vector.broadcast %273 : vector<1x256xf32> to vector<2x256xf32>
    %275 = arith.mulf %272, %274 : vector<2x256xf32>
    %276 = arith.addf %266, %275 : vector<2x256xf32>
    %277 = vector.broadcast %25 : f32 to vector<2x256xf32>
    %278 = arith.mulf %277, %6 : vector<2x256xf32>
    %279 = vector.broadcast %74 : f32 to vector<2x256xf32>
    %280 = arith.mulf %279, %7 : vector<2x256xf32>
    %281 = arith.addf %278, %280 : vector<2x256xf32>
    %c16_i32 = arith.constant 16 : i32
    %282 = tpu.dynamic_rotate %281 by %c16_i32 dim 1 : vector<2x256xf32>, i32 -> vector<2x256xf32>
    %c17_43 = arith.constant 17 : index
    %c0_44 = arith.constant 0 : index
    %283 = vector.load %arg2[%c17_43, %c0_44] : memref<49x256xf32, #tpu.memory_space<vmem>>, vector<1x256xf32>
    %284 = vector.broadcast %283 : vector<1x256xf32> to vector<2x256xf32>
    %285 = arith.mulf %282, %284 : vector<2x256xf32>
    %286 = arith.addf %276, %285 : vector<2x256xf32>
    %287 = vector.broadcast %26 : f32 to vector<2x256xf32>
    %288 = arith.mulf %287, %6 : vector<2x256xf32>
    %289 = vector.broadcast %75 : f32 to vector<2x256xf32>
    %290 = arith.mulf %289, %7 : vector<2x256xf32>
    %291 = arith.addf %288, %290 : vector<2x256xf32>
    %c15_i32 = arith.constant 15 : i32
    %292 = tpu.dynamic_rotate %291 by %c15_i32 dim 1 : vector<2x256xf32>, i32 -> vector<2x256xf32>
    %c18_45 = arith.constant 18 : index
    %c0_46 = arith.constant 0 : index
    %293 = vector.load %arg2[%c18_45, %c0_46] : memref<49x256xf32, #tpu.memory_space<vmem>>, vector<1x256xf32>
    %294 = vector.broadcast %293 : vector<1x256xf32> to vector<2x256xf32>
    %295 = arith.mulf %292, %294 : vector<2x256xf32>
    %296 = arith.addf %286, %295 : vector<2x256xf32>
    %297 = vector.broadcast %27 : f32 to vector<2x256xf32>
    %298 = arith.mulf %297, %6 : vector<2x256xf32>
    %299 = vector.broadcast %76 : f32 to vector<2x256xf32>
    %300 = arith.mulf %299, %7 : vector<2x256xf32>
    %301 = arith.addf %298, %300 : vector<2x256xf32>
    %c14_i32 = arith.constant 14 : i32
    %302 = tpu.dynamic_rotate %301 by %c14_i32 dim 1 : vector<2x256xf32>, i32 -> vector<2x256xf32>
    %c19_47 = arith.constant 19 : index
    %c0_48 = arith.constant 0 : index
    %303 = vector.load %arg2[%c19_47, %c0_48] : memref<49x256xf32, #tpu.memory_space<vmem>>, vector<1x256xf32>
    %304 = vector.broadcast %303 : vector<1x256xf32> to vector<2x256xf32>
    %305 = arith.mulf %302, %304 : vector<2x256xf32>
    %306 = arith.addf %296, %305 : vector<2x256xf32>
    %307 = vector.broadcast %28 : f32 to vector<2x256xf32>
    %308 = arith.mulf %307, %6 : vector<2x256xf32>
    %309 = vector.broadcast %77 : f32 to vector<2x256xf32>
    %310 = arith.mulf %309, %7 : vector<2x256xf32>
    %311 = arith.addf %308, %310 : vector<2x256xf32>
    %c13_i32 = arith.constant 13 : i32
    %312 = tpu.dynamic_rotate %311 by %c13_i32 dim 1 : vector<2x256xf32>, i32 -> vector<2x256xf32>
    %c20_49 = arith.constant 20 : index
    %c0_50 = arith.constant 0 : index
    %313 = vector.load %arg2[%c20_49, %c0_50] : memref<49x256xf32, #tpu.memory_space<vmem>>, vector<1x256xf32>
    %314 = vector.broadcast %313 : vector<1x256xf32> to vector<2x256xf32>
    %315 = arith.mulf %312, %314 : vector<2x256xf32>
    %316 = arith.addf %306, %315 : vector<2x256xf32>
    %317 = vector.broadcast %29 : f32 to vector<2x256xf32>
    %318 = arith.mulf %317, %6 : vector<2x256xf32>
    %319 = vector.broadcast %78 : f32 to vector<2x256xf32>
    %320 = arith.mulf %319, %7 : vector<2x256xf32>
    %321 = arith.addf %318, %320 : vector<2x256xf32>
    %c3_i32 = arith.constant 3 : i32
    %322 = tpu.dynamic_rotate %321 by %c3_i32 dim 1 : vector<2x256xf32>, i32 -> vector<2x256xf32>
    %c21_51 = arith.constant 21 : index
    %c0_52 = arith.constant 0 : index
    %323 = vector.load %arg2[%c21_51, %c0_52] : memref<49x256xf32, #tpu.memory_space<vmem>>, vector<1x256xf32>
    %324 = vector.broadcast %323 : vector<1x256xf32> to vector<2x256xf32>
    %325 = arith.mulf %322, %324 : vector<2x256xf32>
    %326 = arith.addf %316, %325 : vector<2x256xf32>
    %327 = vector.broadcast %30 : f32 to vector<2x256xf32>
    %328 = arith.mulf %327, %6 : vector<2x256xf32>
    %329 = vector.broadcast %79 : f32 to vector<2x256xf32>
    %330 = arith.mulf %329, %7 : vector<2x256xf32>
    %331 = arith.addf %328, %330 : vector<2x256xf32>
    %c2_i32 = arith.constant 2 : i32
    %332 = tpu.dynamic_rotate %331 by %c2_i32 dim 1 : vector<2x256xf32>, i32 -> vector<2x256xf32>
    %c22_53 = arith.constant 22 : index
    %c0_54 = arith.constant 0 : index
    %333 = vector.load %arg2[%c22_53, %c0_54] : memref<49x256xf32, #tpu.memory_space<vmem>>, vector<1x256xf32>
    %334 = vector.broadcast %333 : vector<1x256xf32> to vector<2x256xf32>
    %335 = arith.mulf %332, %334 : vector<2x256xf32>
    %336 = arith.addf %326, %335 : vector<2x256xf32>
    %337 = vector.broadcast %31 : f32 to vector<2x256xf32>
    %338 = arith.mulf %337, %6 : vector<2x256xf32>
    %339 = vector.broadcast %80 : f32 to vector<2x256xf32>
    %340 = arith.mulf %339, %7 : vector<2x256xf32>
    %341 = arith.addf %338, %340 : vector<2x256xf32>
    %c1_i32 = arith.constant 1 : i32
    %342 = tpu.dynamic_rotate %341 by %c1_i32 dim 1 : vector<2x256xf32>, i32 -> vector<2x256xf32>
    %c23_55 = arith.constant 23 : index
    %c0_56 = arith.constant 0 : index
    %343 = vector.load %arg2[%c23_55, %c0_56] : memref<49x256xf32, #tpu.memory_space<vmem>>, vector<1x256xf32>
    %344 = vector.broadcast %343 : vector<1x256xf32> to vector<2x256xf32>
    %345 = arith.mulf %342, %344 : vector<2x256xf32>
    %346 = arith.addf %336, %345 : vector<2x256xf32>
    %347 = vector.broadcast %32 : f32 to vector<2x256xf32>
    %348 = arith.mulf %347, %6 : vector<2x256xf32>
    %349 = vector.broadcast %81 : f32 to vector<2x256xf32>
    %350 = arith.mulf %349, %7 : vector<2x256xf32>
    %351 = arith.addf %348, %350 : vector<2x256xf32>
    %c24_57 = arith.constant 24 : index
    %c0_58 = arith.constant 0 : index
    %352 = vector.load %arg2[%c24_57, %c0_58] : memref<49x256xf32, #tpu.memory_space<vmem>>, vector<1x256xf32>
    %353 = vector.broadcast %352 : vector<1x256xf32> to vector<2x256xf32>
    %354 = arith.mulf %351, %353 : vector<2x256xf32>
    %355 = arith.addf %346, %354 : vector<2x256xf32>
    %356 = vector.broadcast %33 : f32 to vector<2x256xf32>
    %357 = arith.mulf %356, %6 : vector<2x256xf32>
    %358 = vector.broadcast %82 : f32 to vector<2x256xf32>
    %359 = arith.mulf %358, %7 : vector<2x256xf32>
    %360 = arith.addf %357, %359 : vector<2x256xf32>
    %c255_i32 = arith.constant 255 : i32
    %361 = tpu.dynamic_rotate %360 by %c255_i32 dim 1 : vector<2x256xf32>, i32 -> vector<2x256xf32>
    %c25_59 = arith.constant 25 : index
    %c0_60 = arith.constant 0 : index
    %362 = vector.load %arg2[%c25_59, %c0_60] : memref<49x256xf32, #tpu.memory_space<vmem>>, vector<1x256xf32>
    %363 = vector.broadcast %362 : vector<1x256xf32> to vector<2x256xf32>
    %364 = arith.mulf %361, %363 : vector<2x256xf32>
    %365 = arith.addf %355, %364 : vector<2x256xf32>
    %366 = vector.broadcast %34 : f32 to vector<2x256xf32>
    %367 = arith.mulf %366, %6 : vector<2x256xf32>
    %368 = vector.broadcast %83 : f32 to vector<2x256xf32>
    %369 = arith.mulf %368, %7 : vector<2x256xf32>
    %370 = arith.addf %367, %369 : vector<2x256xf32>
    %c254_i32 = arith.constant 254 : i32
    %371 = tpu.dynamic_rotate %370 by %c254_i32 dim 1 : vector<2x256xf32>, i32 -> vector<2x256xf32>
    %c26_61 = arith.constant 26 : index
    %c0_62 = arith.constant 0 : index
    %372 = vector.load %arg2[%c26_61, %c0_62] : memref<49x256xf32, #tpu.memory_space<vmem>>, vector<1x256xf32>
    %373 = vector.broadcast %372 : vector<1x256xf32> to vector<2x256xf32>
    %374 = arith.mulf %371, %373 : vector<2x256xf32>
    %375 = arith.addf %365, %374 : vector<2x256xf32>
    %376 = vector.broadcast %35 : f32 to vector<2x256xf32>
    %377 = arith.mulf %376, %6 : vector<2x256xf32>
    %378 = vector.broadcast %84 : f32 to vector<2x256xf32>
    %379 = arith.mulf %378, %7 : vector<2x256xf32>
    %380 = arith.addf %377, %379 : vector<2x256xf32>
    %c253_i32 = arith.constant 253 : i32
    %381 = tpu.dynamic_rotate %380 by %c253_i32 dim 1 : vector<2x256xf32>, i32 -> vector<2x256xf32>
    %c27_63 = arith.constant 27 : index
    %c0_64 = arith.constant 0 : index
    %382 = vector.load %arg2[%c27_63, %c0_64] : memref<49x256xf32, #tpu.memory_space<vmem>>, vector<1x256xf32>
    %383 = vector.broadcast %382 : vector<1x256xf32> to vector<2x256xf32>
    %384 = arith.mulf %381, %383 : vector<2x256xf32>
    %385 = arith.addf %375, %384 : vector<2x256xf32>
    %386 = vector.broadcast %36 : f32 to vector<2x256xf32>
    %387 = arith.mulf %386, %6 : vector<2x256xf32>
    %388 = vector.broadcast %85 : f32 to vector<2x256xf32>
    %389 = arith.mulf %388, %7 : vector<2x256xf32>
    %390 = arith.addf %387, %389 : vector<2x256xf32>
    %c243_i32 = arith.constant 243 : i32
    %391 = tpu.dynamic_rotate %390 by %c243_i32 dim 1 : vector<2x256xf32>, i32 -> vector<2x256xf32>
    %c28_65 = arith.constant 28 : index
    %c0_66 = arith.constant 0 : index
    %392 = vector.load %arg2[%c28_65, %c0_66] : memref<49x256xf32, #tpu.memory_space<vmem>>, vector<1x256xf32>
    %393 = vector.broadcast %392 : vector<1x256xf32> to vector<2x256xf32>
    %394 = arith.mulf %391, %393 : vector<2x256xf32>
    %395 = arith.addf %385, %394 : vector<2x256xf32>
    %396 = vector.broadcast %37 : f32 to vector<2x256xf32>
    %397 = arith.mulf %396, %6 : vector<2x256xf32>
    %398 = vector.broadcast %86 : f32 to vector<2x256xf32>
    %399 = arith.mulf %398, %7 : vector<2x256xf32>
    %400 = arith.addf %397, %399 : vector<2x256xf32>
    %c242_i32 = arith.constant 242 : i32
    %401 = tpu.dynamic_rotate %400 by %c242_i32 dim 1 : vector<2x256xf32>, i32 -> vector<2x256xf32>
    %c29_67 = arith.constant 29 : index
    %c0_68 = arith.constant 0 : index
    %402 = vector.load %arg2[%c29_67, %c0_68] : memref<49x256xf32, #tpu.memory_space<vmem>>, vector<1x256xf32>
    %403 = vector.broadcast %402 : vector<1x256xf32> to vector<2x256xf32>
    %404 = arith.mulf %401, %403 : vector<2x256xf32>
    %405 = arith.addf %395, %404 : vector<2x256xf32>
    %406 = vector.broadcast %38 : f32 to vector<2x256xf32>
    %407 = arith.mulf %406, %6 : vector<2x256xf32>
    %408 = vector.broadcast %87 : f32 to vector<2x256xf32>
    %409 = arith.mulf %408, %7 : vector<2x256xf32>
    %410 = arith.addf %407, %409 : vector<2x256xf32>
    %c241_i32 = arith.constant 241 : i32
    %411 = tpu.dynamic_rotate %410 by %c241_i32 dim 1 : vector<2x256xf32>, i32 -> vector<2x256xf32>
    %c30_69 = arith.constant 30 : index
    %c0_70 = arith.constant 0 : index
    %412 = vector.load %arg2[%c30_69, %c0_70] : memref<49x256xf32, #tpu.memory_space<vmem>>, vector<1x256xf32>
    %413 = vector.broadcast %412 : vector<1x256xf32> to vector<2x256xf32>
    %414 = arith.mulf %411, %413 : vector<2x256xf32>
    %415 = arith.addf %405, %414 : vector<2x256xf32>
    %416 = vector.broadcast %39 : f32 to vector<2x256xf32>
    %417 = arith.mulf %416, %6 : vector<2x256xf32>
    %418 = vector.broadcast %88 : f32 to vector<2x256xf32>
    %419 = arith.mulf %418, %7 : vector<2x256xf32>
    %420 = arith.addf %417, %419 : vector<2x256xf32>
    %c240_i32 = arith.constant 240 : i32
    %421 = tpu.dynamic_rotate %420 by %c240_i32 dim 1 : vector<2x256xf32>, i32 -> vector<2x256xf32>
    %c31_71 = arith.constant 31 : index
    %c0_72 = arith.constant 0 : index
    %422 = vector.load %arg2[%c31_71, %c0_72] : memref<49x256xf32, #tpu.memory_space<vmem>>, vector<1x256xf32>
    %423 = vector.broadcast %422 : vector<1x256xf32> to vector<2x256xf32>
    %424 = arith.mulf %421, %423 : vector<2x256xf32>
    %425 = arith.addf %415, %424 : vector<2x256xf32>
    %426 = vector.broadcast %40 : f32 to vector<2x256xf32>
    %427 = arith.mulf %426, %6 : vector<2x256xf32>
    %428 = vector.broadcast %89 : f32 to vector<2x256xf32>
    %429 = arith.mulf %428, %7 : vector<2x256xf32>
    %430 = arith.addf %427, %429 : vector<2x256xf32>
    %c239_i32 = arith.constant 239 : i32
    %431 = tpu.dynamic_rotate %430 by %c239_i32 dim 1 : vector<2x256xf32>, i32 -> vector<2x256xf32>
    %c32_73 = arith.constant 32 : index
    %c0_74 = arith.constant 0 : index
    %432 = vector.load %arg2[%c32_73, %c0_74] : memref<49x256xf32, #tpu.memory_space<vmem>>, vector<1x256xf32>
    %433 = vector.broadcast %432 : vector<1x256xf32> to vector<2x256xf32>
    %434 = arith.mulf %431, %433 : vector<2x256xf32>
    %435 = arith.addf %425, %434 : vector<2x256xf32>
    %436 = vector.broadcast %41 : f32 to vector<2x256xf32>
    %437 = arith.mulf %436, %6 : vector<2x256xf32>
    %438 = vector.broadcast %90 : f32 to vector<2x256xf32>
    %439 = arith.mulf %438, %7 : vector<2x256xf32>
    %440 = arith.addf %437, %439 : vector<2x256xf32>
    %c238_i32 = arith.constant 238 : i32
    %441 = tpu.dynamic_rotate %440 by %c238_i32 dim 1 : vector<2x256xf32>, i32 -> vector<2x256xf32>
    %c33_75 = arith.constant 33 : index
    %c0_76 = arith.constant 0 : index
    %442 = vector.load %arg2[%c33_75, %c0_76] : memref<49x256xf32, #tpu.memory_space<vmem>>, vector<1x256xf32>
    %443 = vector.broadcast %442 : vector<1x256xf32> to vector<2x256xf32>
    %444 = arith.mulf %441, %443 : vector<2x256xf32>
    %445 = arith.addf %435, %444 : vector<2x256xf32>
    %446 = vector.broadcast %42 : f32 to vector<2x256xf32>
    %447 = arith.mulf %446, %6 : vector<2x256xf32>
    %448 = vector.broadcast %91 : f32 to vector<2x256xf32>
    %449 = arith.mulf %448, %7 : vector<2x256xf32>
    %450 = arith.addf %447, %449 : vector<2x256xf32>
    %c237_i32 = arith.constant 237 : i32
    %451 = tpu.dynamic_rotate %450 by %c237_i32 dim 1 : vector<2x256xf32>, i32 -> vector<2x256xf32>
    %c34_77 = arith.constant 34 : index
    %c0_78 = arith.constant 0 : index
    %452 = vector.load %arg2[%c34_77, %c0_78] : memref<49x256xf32, #tpu.memory_space<vmem>>, vector<1x256xf32>
    %453 = vector.broadcast %452 : vector<1x256xf32> to vector<2x256xf32>
    %454 = arith.mulf %451, %453 : vector<2x256xf32>
    %455 = arith.addf %445, %454 : vector<2x256xf32>
    %456 = vector.broadcast %43 : f32 to vector<2x256xf32>
    %457 = arith.mulf %456, %6 : vector<2x256xf32>
    %458 = vector.broadcast %92 : f32 to vector<2x256xf32>
    %459 = arith.mulf %458, %7 : vector<2x256xf32>
    %460 = arith.addf %457, %459 : vector<2x256xf32>
    %c227_i32 = arith.constant 227 : i32
    %461 = tpu.dynamic_rotate %460 by %c227_i32 dim 1 : vector<2x256xf32>, i32 -> vector<2x256xf32>
    %c35_79 = arith.constant 35 : index
    %c0_80 = arith.constant 0 : index
    %462 = vector.load %arg2[%c35_79, %c0_80] : memref<49x256xf32, #tpu.memory_space<vmem>>, vector<1x256xf32>
    %463 = vector.broadcast %462 : vector<1x256xf32> to vector<2x256xf32>
    %464 = arith.mulf %461, %463 : vector<2x256xf32>
    %465 = arith.addf %455, %464 : vector<2x256xf32>
    %466 = vector.broadcast %44 : f32 to vector<2x256xf32>
    %467 = arith.mulf %466, %6 : vector<2x256xf32>
    %468 = vector.broadcast %93 : f32 to vector<2x256xf32>
    %469 = arith.mulf %468, %7 : vector<2x256xf32>
    %470 = arith.addf %467, %469 : vector<2x256xf32>
    %c226_i32 = arith.constant 226 : i32
    %471 = tpu.dynamic_rotate %470 by %c226_i32 dim 1 : vector<2x256xf32>, i32 -> vector<2x256xf32>
    %c36_81 = arith.constant 36 : index
    %c0_82 = arith.constant 0 : index
    %472 = vector.load %arg2[%c36_81, %c0_82] : memref<49x256xf32, #tpu.memory_space<vmem>>, vector<1x256xf32>
    %473 = vector.broadcast %472 : vector<1x256xf32> to vector<2x256xf32>
    %474 = arith.mulf %471, %473 : vector<2x256xf32>
    %475 = arith.addf %465, %474 : vector<2x256xf32>
    %476 = vector.broadcast %45 : f32 to vector<2x256xf32>
    %477 = arith.mulf %476, %6 : vector<2x256xf32>
    %478 = vector.broadcast %94 : f32 to vector<2x256xf32>
    %479 = arith.mulf %478, %7 : vector<2x256xf32>
    %480 = arith.addf %477, %479 : vector<2x256xf32>
    %c225_i32 = arith.constant 225 : i32
    %481 = tpu.dynamic_rotate %480 by %c225_i32 dim 1 : vector<2x256xf32>, i32 -> vector<2x256xf32>
    %c37_83 = arith.constant 37 : index
    %c0_84 = arith.constant 0 : index
    %482 = vector.load %arg2[%c37_83, %c0_84] : memref<49x256xf32, #tpu.memory_space<vmem>>, vector<1x256xf32>
    %483 = vector.broadcast %482 : vector<1x256xf32> to vector<2x256xf32>
    %484 = arith.mulf %481, %483 : vector<2x256xf32>
    %485 = arith.addf %475, %484 : vector<2x256xf32>
    %486 = vector.broadcast %46 : f32 to vector<2x256xf32>
    %487 = arith.mulf %486, %6 : vector<2x256xf32>
    %488 = vector.broadcast %95 : f32 to vector<2x256xf32>
    %489 = arith.mulf %488, %7 : vector<2x256xf32>
    %490 = arith.addf %487, %489 : vector<2x256xf32>
    %c224_i32 = arith.constant 224 : i32
    %491 = tpu.dynamic_rotate %490 by %c224_i32 dim 1 : vector<2x256xf32>, i32 -> vector<2x256xf32>
    %c38_85 = arith.constant 38 : index
    %c0_86 = arith.constant 0 : index
    %492 = vector.load %arg2[%c38_85, %c0_86] : memref<49x256xf32, #tpu.memory_space<vmem>>, vector<1x256xf32>
    %493 = vector.broadcast %492 : vector<1x256xf32> to vector<2x256xf32>
    %494 = arith.mulf %491, %493 : vector<2x256xf32>
    %495 = arith.addf %485, %494 : vector<2x256xf32>
    %496 = vector.broadcast %47 : f32 to vector<2x256xf32>
    %497 = arith.mulf %496, %6 : vector<2x256xf32>
    %498 = vector.broadcast %96 : f32 to vector<2x256xf32>
    %499 = arith.mulf %498, %7 : vector<2x256xf32>
    %500 = arith.addf %497, %499 : vector<2x256xf32>
    %c223_i32 = arith.constant 223 : i32
    %501 = tpu.dynamic_rotate %500 by %c223_i32 dim 1 : vector<2x256xf32>, i32 -> vector<2x256xf32>
    %c39_87 = arith.constant 39 : index
    %c0_88 = arith.constant 0 : index
    %502 = vector.load %arg2[%c39_87, %c0_88] : memref<49x256xf32, #tpu.memory_space<vmem>>, vector<1x256xf32>
    %503 = vector.broadcast %502 : vector<1x256xf32> to vector<2x256xf32>
    %504 = arith.mulf %501, %503 : vector<2x256xf32>
    %505 = arith.addf %495, %504 : vector<2x256xf32>
    %506 = vector.broadcast %48 : f32 to vector<2x256xf32>
    %507 = arith.mulf %506, %6 : vector<2x256xf32>
    %508 = vector.broadcast %97 : f32 to vector<2x256xf32>
    %509 = arith.mulf %508, %7 : vector<2x256xf32>
    %510 = arith.addf %507, %509 : vector<2x256xf32>
    %c222_i32 = arith.constant 222 : i32
    %511 = tpu.dynamic_rotate %510 by %c222_i32 dim 1 : vector<2x256xf32>, i32 -> vector<2x256xf32>
    %c40_89 = arith.constant 40 : index
    %c0_90 = arith.constant 0 : index
    %512 = vector.load %arg2[%c40_89, %c0_90] : memref<49x256xf32, #tpu.memory_space<vmem>>, vector<1x256xf32>
    %513 = vector.broadcast %512 : vector<1x256xf32> to vector<2x256xf32>
    %514 = arith.mulf %511, %513 : vector<2x256xf32>
    %515 = arith.addf %505, %514 : vector<2x256xf32>
    %516 = vector.broadcast %49 : f32 to vector<2x256xf32>
    %517 = arith.mulf %516, %6 : vector<2x256xf32>
    %518 = vector.broadcast %98 : f32 to vector<2x256xf32>
    %519 = arith.mulf %518, %7 : vector<2x256xf32>
    %520 = arith.addf %517, %519 : vector<2x256xf32>
    %c221_i32 = arith.constant 221 : i32
    %521 = tpu.dynamic_rotate %520 by %c221_i32 dim 1 : vector<2x256xf32>, i32 -> vector<2x256xf32>
    %c41_91 = arith.constant 41 : index
    %c0_92 = arith.constant 0 : index
    %522 = vector.load %arg2[%c41_91, %c0_92] : memref<49x256xf32, #tpu.memory_space<vmem>>, vector<1x256xf32>
    %523 = vector.broadcast %522 : vector<1x256xf32> to vector<2x256xf32>
    %524 = arith.mulf %521, %523 : vector<2x256xf32>
    %525 = arith.addf %515, %524 : vector<2x256xf32>
    %526 = vector.broadcast %50 : f32 to vector<2x256xf32>
    %527 = arith.mulf %526, %6 : vector<2x256xf32>
    %528 = vector.broadcast %99 : f32 to vector<2x256xf32>
    %529 = arith.mulf %528, %7 : vector<2x256xf32>
    %530 = arith.addf %527, %529 : vector<2x256xf32>
    %c211_i32 = arith.constant 211 : i32
    %531 = tpu.dynamic_rotate %530 by %c211_i32 dim 1 : vector<2x256xf32>, i32 -> vector<2x256xf32>
    %c42_93 = arith.constant 42 : index
    %c0_94 = arith.constant 0 : index
    %532 = vector.load %arg2[%c42_93, %c0_94] : memref<49x256xf32, #tpu.memory_space<vmem>>, vector<1x256xf32>
    %533 = vector.broadcast %532 : vector<1x256xf32> to vector<2x256xf32>
    %534 = arith.mulf %531, %533 : vector<2x256xf32>
    %535 = arith.addf %525, %534 : vector<2x256xf32>
    %536 = vector.broadcast %51 : f32 to vector<2x256xf32>
    %537 = arith.mulf %536, %6 : vector<2x256xf32>
    %538 = vector.broadcast %100 : f32 to vector<2x256xf32>
    %539 = arith.mulf %538, %7 : vector<2x256xf32>
    %540 = arith.addf %537, %539 : vector<2x256xf32>
    %c210_i32 = arith.constant 210 : i32
    %541 = tpu.dynamic_rotate %540 by %c210_i32 dim 1 : vector<2x256xf32>, i32 -> vector<2x256xf32>
    %c43_95 = arith.constant 43 : index
    %c0_96 = arith.constant 0 : index
    %542 = vector.load %arg2[%c43_95, %c0_96] : memref<49x256xf32, #tpu.memory_space<vmem>>, vector<1x256xf32>
    %543 = vector.broadcast %542 : vector<1x256xf32> to vector<2x256xf32>
    %544 = arith.mulf %541, %543 : vector<2x256xf32>
    %545 = arith.addf %535, %544 : vector<2x256xf32>
    %546 = vector.broadcast %52 : f32 to vector<2x256xf32>
    %547 = arith.mulf %546, %6 : vector<2x256xf32>
    %548 = vector.broadcast %101 : f32 to vector<2x256xf32>
    %549 = arith.mulf %548, %7 : vector<2x256xf32>
    %550 = arith.addf %547, %549 : vector<2x256xf32>
    %c209_i32 = arith.constant 209 : i32
    %551 = tpu.dynamic_rotate %550 by %c209_i32 dim 1 : vector<2x256xf32>, i32 -> vector<2x256xf32>
    %c44_97 = arith.constant 44 : index
    %c0_98 = arith.constant 0 : index
    %552 = vector.load %arg2[%c44_97, %c0_98] : memref<49x256xf32, #tpu.memory_space<vmem>>, vector<1x256xf32>
    %553 = vector.broadcast %552 : vector<1x256xf32> to vector<2x256xf32>
    %554 = arith.mulf %551, %553 : vector<2x256xf32>
    %555 = arith.addf %545, %554 : vector<2x256xf32>
    %556 = vector.broadcast %53 : f32 to vector<2x256xf32>
    %557 = arith.mulf %556, %6 : vector<2x256xf32>
    %558 = vector.broadcast %102 : f32 to vector<2x256xf32>
    %559 = arith.mulf %558, %7 : vector<2x256xf32>
    %560 = arith.addf %557, %559 : vector<2x256xf32>
    %c208_i32 = arith.constant 208 : i32
    %561 = tpu.dynamic_rotate %560 by %c208_i32 dim 1 : vector<2x256xf32>, i32 -> vector<2x256xf32>
    %c45_99 = arith.constant 45 : index
    %c0_100 = arith.constant 0 : index
    %562 = vector.load %arg2[%c45_99, %c0_100] : memref<49x256xf32, #tpu.memory_space<vmem>>, vector<1x256xf32>
    %563 = vector.broadcast %562 : vector<1x256xf32> to vector<2x256xf32>
    %564 = arith.mulf %561, %563 : vector<2x256xf32>
    %565 = arith.addf %555, %564 : vector<2x256xf32>
    %566 = vector.broadcast %54 : f32 to vector<2x256xf32>
    %567 = arith.mulf %566, %6 : vector<2x256xf32>
    %568 = vector.broadcast %103 : f32 to vector<2x256xf32>
    %569 = arith.mulf %568, %7 : vector<2x256xf32>
    %570 = arith.addf %567, %569 : vector<2x256xf32>
    %c207_i32 = arith.constant 207 : i32
    %571 = tpu.dynamic_rotate %570 by %c207_i32 dim 1 : vector<2x256xf32>, i32 -> vector<2x256xf32>
    %c46_101 = arith.constant 46 : index
    %c0_102 = arith.constant 0 : index
    %572 = vector.load %arg2[%c46_101, %c0_102] : memref<49x256xf32, #tpu.memory_space<vmem>>, vector<1x256xf32>
    %573 = vector.broadcast %572 : vector<1x256xf32> to vector<2x256xf32>
    %574 = arith.mulf %571, %573 : vector<2x256xf32>
    %575 = arith.addf %565, %574 : vector<2x256xf32>
    %576 = vector.broadcast %55 : f32 to vector<2x256xf32>
    %577 = arith.mulf %576, %6 : vector<2x256xf32>
    %578 = vector.broadcast %104 : f32 to vector<2x256xf32>
    %579 = arith.mulf %578, %7 : vector<2x256xf32>
    %580 = arith.addf %577, %579 : vector<2x256xf32>
    %c206_i32 = arith.constant 206 : i32
    %581 = tpu.dynamic_rotate %580 by %c206_i32 dim 1 : vector<2x256xf32>, i32 -> vector<2x256xf32>
    %c47_103 = arith.constant 47 : index
    %c0_104 = arith.constant 0 : index
    %582 = vector.load %arg2[%c47_103, %c0_104] : memref<49x256xf32, #tpu.memory_space<vmem>>, vector<1x256xf32>
    %583 = vector.broadcast %582 : vector<1x256xf32> to vector<2x256xf32>
    %584 = arith.mulf %581, %583 : vector<2x256xf32>
    %585 = arith.addf %575, %584 : vector<2x256xf32>
    %586 = vector.broadcast %56 : f32 to vector<2x256xf32>
    %587 = arith.mulf %586, %6 : vector<2x256xf32>
    %588 = vector.broadcast %105 : f32 to vector<2x256xf32>
    %589 = arith.mulf %588, %7 : vector<2x256xf32>
    %590 = arith.addf %587, %589 : vector<2x256xf32>
    %c205_i32 = arith.constant 205 : i32
    %591 = tpu.dynamic_rotate %590 by %c205_i32 dim 1 : vector<2x256xf32>, i32 -> vector<2x256xf32>
    %c48_105 = arith.constant 48 : index
    %c0_106 = arith.constant 0 : index
    %592 = vector.load %arg2[%c48_105, %c0_106] : memref<49x256xf32, #tpu.memory_space<vmem>>, vector<1x256xf32>
    %593 = vector.broadcast %592 : vector<1x256xf32> to vector<2x256xf32>
    %594 = arith.mulf %591, %593 : vector<2x256xf32>
    %595 = arith.addf %585, %594 : vector<2x256xf32>
    %cst_107 = arith.constant 0.000000e+00 : f32
    %596 = vector.broadcast %cst_107 : f32 to vector<2x256xf32>
    %597 = arith.maximumf %595, %596 : vector<2x256xf32>
    %598 = arith.negf %597 : vector<2x256xf32>
    %599 = math.exp %598 : vector<2x256xf32>
    %cst_108 = arith.constant 1.000000e+00 : f32
    %600 = vector.broadcast %cst_108 : f32 to vector<2x256xf32>
    %601 = arith.addf %600, %599 : vector<2x256xf32>
    %602 = arith.divf %600, %601 : vector<2x256xf32>
    %c0_109 = arith.constant 0 : index
    %c0_110 = arith.constant 0 : index
    %c0_111 = arith.constant 0 : index
    %603 = vector.load %arg4[%c0_109, %c0_110, %c0_111] : memref<2x8x256xf32, #tpu.memory_space<vmem>>, vector<2x8x256xf32>
    %c0_112 = arith.constant 0 : index
    %c0_113 = arith.constant 0 : index
    %c0_114 = arith.constant 0 : index
    %604 = vector.load %arg3[%c0_112, %c0_113, %c0_114] : memref<2x8x1xf32, #tpu.memory_space<vmem>>, vector<2x8x1xf32>
    %605 = vector.broadcast %604 : vector<2x8x1xf32> to vector<2x8x256xf32>
    %606 = arith.mulf %603, %605 : vector<2x8x256xf32>
    %607 = vector.shape_cast %602 : vector<2x256xf32> to vector<2x1x256xf32>
    %608 = vector.broadcast %607 : vector<2x1x256xf32> to vector<2x8x256xf32>
    %609 = arith.mulf %606, %608 : vector<2x8x256xf32>
    %cst_115 = arith.constant 0.000000e+00 : f32
    %610 = vector.broadcast %cst_115 : f32 to vector<2x8x256xf32>
    %611 = arith.maximumf %609, %610 : vector<2x8x256xf32>
    %c0_116 = arith.constant 0 : index
    %c0_117 = arith.constant 0 : index
    %c0_118 = arith.constant 0 : index
    %612 = vector.load %arg5[%c0_116, %c0_117, %c0_118] : memref<2x8x256xf32, #tpu.memory_space<vmem>>, vector<2x8x256xf32>
    tpu.vector_store %arg5[%c0_116, %c0_117, %c0_118], %611 {strides = array<i32>} : memref<2x8x256xf32, #tpu.memory_space<vmem>>, vector<2x8x256xf32>,
    return
  }
  func.func @transform_0(%arg0: i32, %arg1: memref<98xf32, #tpu.memory_space<smem>>) -> (i32, i32) {
    %c0_i32 = arith.constant 0 : i32
    %c0_i32_0 = arith.constant 0 : i32
    %c0_i32_1 = arith.constant 0 : i32
    return %c0_i32, %c0_i32_0 : i32, i32
  }
  func.func @transform_1(%arg0: i32, %arg1: memref<98xf32, #tpu.memory_space<smem>>) -> (i32, i32, i32) {
    %c0_i32 = arith.constant 0 : i32
    %c0_i32_0 = arith.constant 0 : i32
    %c0_i32_1 = arith.constant 0 : i32
    return %arg0, %c0_i32, %c0_i32_0 : i32, i32, i32
  }
  func.func @transform_2(%arg0: i32, %arg1: memref<98xf32, #tpu.memory_space<smem>>) -> (i32, i32, i32) {
    %c0_i32 = arith.constant 0 : i32
    %c0_i32_0 = arith.constant 0 : i32
    %c0_i32_1 = arith.constant 0 : i32
    return %arg0, %c0_i32, %c0_i32_0 : i32, i32, i32
  }
  func.func @transform_3(%arg0: i32, %arg1: memref<98xf32, #tpu.memory_space<smem>>) -> (i32, i32, i32) {
    %c0_i32 = arith.constant 0 : i32
    %c0_i32_0 = arith.constant 0 : i32
    %c0_i32_1 = arith.constant 0 : i32
    return %arg0, %c0_i32, %c0_i32_0 : i32, i32, i32
  }
}

</mosaic_0001>

<llo_original>
// kernel: tpu_custom_call.1
$region0: #{tpu_custom_call.1}
  #allocation0 [shape = 'u32[]', space=smem, size = 0x4, offset = 0x4, fixed_abs, tag = 'smem constant byte address 0x4 - core index']
  #allocation1 [shape = 'u32[144,128]{1,0:T(1,128)}', space=vmem, size = 0x12000, scoped, tag = 'internal scratch']
  #allocation2 [shape = 's32[1]{0}', space=sflag, size = 0x4, scoped, tag = 'scoped memory for tpu_custom_call.1']
  #allocation3 [shape = 'u8[512]{0}', space=smem, size = 0x200, scoped, tag = 'prefetched SMEM operand 0']
  %s0 = inlined_call_operand.vmem [shape: f32[98], index: 0, kind: input, shape index: {}]
  %s1 = inlined_call_operand.hbm [shape: f32[49,256], index: 1, kind: input, shape index: {}]
  %s2 = inlined_call_operand.vmem [shape: f32[2,8,1], index: 2, kind: input, shape index: {}]
  %s3 = inlined_call_operand.hbm [shape: f32[2,8,256], index: 3, kind: input, shape index: {}]
  %s4 = inlined_call_operand.hbm [shape: f32[2,8,256], index: 4, kind: output, shape index: {}]
  %s5 = sld [smem:[#allocation0]]
  $region30: #{tpu_custom_call.1} parent=0
    _
  %s7 = ssub.s32 1, %s5
  %s8 = scalar_select 0, %s7, %s5
  %s9 = sshll.u32 %s0, 4
  %s10 = int_to_ptr.vmem [resolvable:$true] %s9
  %12 = dma.vmem_to_smem %s10, 16, [#allocation3], [#allocation2]
  %13 = dma.done [#allocation2], 16
  %14 = sfence
  $region1: #{tpu_custom_call.1} parent=0
    #allocation4 [shape = 'u8[57344]{0}', space=vmem, size = 0xe000, scoped, tag = 'input window, operand 1, single buffered']
    #allocation5 [shape = 's32[1]{0}', space=sflag, size = 0x4, scoped, tag = 'scoped memory for tpu_custom_call.1']
    #allocation6 [shape = 's32[1]{0}', space=sflag, size = 0x4, scoped, tag = 'scoped memory for tpu_custom_call.1']
    #allocation7 [shape = 'u8[16384]{0}', space=vmem, size = 0x4000, scoped, tag = 'input window, operand 3, single buffered']
    #allocation8 [shape = 's32[1]{0}', space=sflag, size = 0x4, scoped, tag = 'scoped memory for tpu_custom_call.1']
    #allocation9 [shape = 'u8[16384]{0}', space=vmem, size = 0x4000, scoped, tag = 'output window, operand 0, single buffered']
    %15 = vsyncpa [#allocation5], 0
    %16 = vsyncpa [#allocation8], 0
    %17 = vsyncpa [#allocation6], 0
    // Predicated region
    $region2: #{tpu_custom_call.1} parent=1 // pred_check
      _
    $region3: #{tpu_custom_call.1} parent=1 // pred_check_branch
      %19 = sbr.rel (0) target = $region5
    $region4: #{tpu_custom_call.1} parent=1 // pred_region
      %s21 = ssub.s32 1792, 1792
      %22 = vsyncadd [#allocation5], %s21
      %s23 = sshll.u32 [#allocation4], 4
      %s24 = int_to_ptr.vmem [resolvable:$true] %s23
      %29 = dma.hbm_to_vmem [thread:$0]  %s1, 1792, %s24, [#allocation5], 256, 256, 16
    $region5: #{tpu_custom_call.1} parent=1 // pred_fallthru
      _
    // Predicated region
    $region6: #{tpu_custom_call.1} parent=1 // pred_check
      _
    $region7: #{tpu_custom_call.1} parent=1 // pred_check_branch
      %31 = sbr.rel (0) target = $region9
    $region8: #{tpu_custom_call.1} parent=1 // pred_region
      _
    $region9: #{tpu_custom_call.1} parent=1 // pred_fallthru
      _
    // Predicated region
    $region10: #{tpu_custom_call.1} parent=1 // pred_check
      _
    $region11: #{tpu_custom_call.1} parent=1 // pred_check_branch
      %33 = sbr.rel (0) target = $region13
    $region12: #{tpu_custom_call.1} parent=1 // pred_region
      %s35 = ssub.s32 512, 512
      %36 = vsyncadd [#allocation8], %s35
      %s37 = sshll.u32 [#allocation7], 4
      %s38 = int_to_ptr.vmem [resolvable:$true] %s37
      %43 = dma.hbm_to_vmem [thread:$0]  %s3, 512, %s38, [#allocation8], 256, 256, 16
    $region13: #{tpu_custom_call.1} parent=1 // pred_fallthru
      _
    // Predicated region
    $region14: #{tpu_custom_call.1} parent=1 // pred_check
      _
    $region15: #{tpu_custom_call.1} parent=1 // pred_check_branch
      %45 = sbr.rel (0) target = $region17
    $region16: #{tpu_custom_call.1} parent=1 // pred_region
      %46 = dma.done [#allocation5], 1792
    $region17: #{tpu_custom_call.1} parent=1 // pred_fallthru
      _
    // Predicated region
    $region18: #{tpu_custom_call.1} parent=1 // pred_check
      _
    $region19: #{tpu_custom_call.1} parent=1 // pred_check_branch
      %48 = sbr.rel (0) target = $region21
    $region20: #{tpu_custom_call.1} parent=1 // pred_region
      %49 = dma.done [#allocation8], 512
    $region21: #{tpu_custom_call.1} parent=1 // pred_fallthru
      _
    %v50 = vld [vmem:[#allocation7] sm:$0xff]
    %v51 = vld [vmem:[#allocation7 + $0x8] sm:$0xff]
    %v52 = vld [vmem:[#allocation7 + $0x10] sm:$0xff]
    %v53 = vld [vmem:[#allocation7 + $0x18] sm:$0xff]
    %v54 = vld [vmem:[%s2] sm:$0xff]
    %v55 = vld [vmem:[%s2 + $0x8] sm:$0xff]
    %57 = vset.pattern.permute.xlu0 0
    %58 = vperm.xlu0 %57, %v54
    %v59 = vpop.permute.xlu0 %58
    %62 = vset.pattern.permute.xlu0 0
    %63 = vperm.xlu0 %62, %v55
    %v64 = vpop.permute.xlu0 %63
    %v66 = vmul.f32 %v50, %v59
    %v67 = vmul.f32 %v51, %v59
    %v68 = vmul.f32 %v52, %v64
    %v69 = vmul.f32 %v53, %v64
    %v70 = vrot.slane %v66, 4
    %v71 = vadd.f32 %v66, %v70
    %v72 = vrot.slane %v71, 2
    %v73 = vadd.f32 %v71, %v72
    %v74 = vrot.slane %v73, 1
    %v75 = vadd.f32 %v73, %v74
    %v76 = vrot.slane %v67, 4
    %v77 = vadd.f32 %v67, %v76
    %v78 = vrot.slane %v77, 2
    %v79 = vadd.f32 %v77, %v78
    %v80 = vrot.slane %v79, 1
    %v81 = vadd.f32 %v79, %v80
    %v82 = vrot.slane %v68, 4
    %v83 = vadd.f32 %v68, %v82
    %v84 = vrot.slane %v83, 2
    %v85 = vadd.f32 %v83, %v84
    %v86 = vrot.slane %v85, 1
    %v87 = vadd.f32 %v85, %v86
    %v88 = vrot.slane %v69, 4
    %v89 = vadd.f32 %v69, %v88
    %v90 = vrot.slane %v89, 2
    %v91 = vadd.f32 %v89, %v90
    %v92 = vrot.slane %v91, 1
    %v93 = vadd.f32 %v91, %v92
    %v94 = vrcp.pop 8.0
    %v95 = vmul.f32 %v75, %v94
    %v96 = vmul.f32 %v81, %v94
    %v97 = vmul.f32 %v87, %v94
    %v98 = vmul.f32 %v93, %v94
    %v99 = vrot.slane %v66, 4
    %v100 = vmax.f32 %v66, %v99
    %v101 = vrot.slane %v100, 2
    %v102 = vmax.f32 %v100, %v101
    %v103 = vrot.slane %v102, 1
    %v104 = vmax.f32 %v102, %v103
    %v105 = vrot.slane %v67, 4
    %v106 = vmax.f32 %v67, %v105
    %v107 = vrot.slane %v106, 2
    %v108 = vmax.f32 %v106, %v107
    %v109 = vrot.slane %v108, 1
    %v110 = vmax.f32 %v108, %v109
    %v111 = vrot.slane %v68, 4
    %v112 = vmax.f32 %v68, %v111
    %v113 = vrot.slane %v112, 2
    %v114 = vmax.f32 %v112, %v113
    %v115 = vrot.slane %v114, 1
    %v116 = vmax.f32 %v114, %v115
    %v117 = vrot.slane %v69, 4
    %v118 = vmax.f32 %v69, %v117
    %v119 = vrot.slane %v118, 2
    %v120 = vmax.f32 %v118, %v119
    %v121 = vrot.slane %v120, 1
    %v122 = vmax.f32 %v120, %v121
    %s123 = sld [smem:[#allocation3]]
    %s124 = sld [smem:[#allocation3 + $0x1]]
    %s125 = sld [smem:[#allocation3 + $0x2]]
    %s126 = sld [smem:[#allocation3 + $0x3]]
    %s127 = sld [smem:[#allocation3 + $0x4]]
    %s128 = sld [smem:[#allocation3 + $0x5]]
    %s129 = sld [smem:[#allocation3 + $0x6]]
    %s130 = sld [smem:[#allocation3 + $0x7]]
    %s131 = sld [smem:[#allocation3 + $0x8]]
    %s132 = sld [smem:[#allocation3 + $0x9]]
    %s133 = sld [smem:[#allocation3 + $0xa]]
    %s134 = sld [smem:[#allocation3 + $0xb]]
    %s135 = sld [smem:[#allocation3 + $0xc]]
    %s136 = sld [smem:[#allocation3 + $0xd]]
    %s137 = sld [smem:[#allocation3 + $0xe]]
    %s138 = sld [smem:[#allocation3 + $0xf]]
    %s139 = sld [smem:[#allocation3 + $0x10]]
    %s140 = sld [smem:[#allocation3 + $0x11]]
    %s141 = sld [smem:[#allocation3 + $0x12]]
    %s142 = sld [smem:[#allocation3 + $0x13]]
    %s143 = sld [smem:[#allocation3 + $0x14]]
    %s144 = sld [smem:[#allocation3 + $0x15]]
    %s145 = sld [smem:[#allocation3 + $0x16]]
    %s146 = sld [smem:[#allocation3 + $0x17]]
    %s147 = sld [smem:[#allocation3 + $0x18]]
    %s148 = sld [smem:[#allocation3 + $0x19]]
    %s149 = sld [smem:[#allocation3 + $0x1a]]
    %s150 = sld [smem:[#allocation3 + $0x1b]]
    %s151 = sld [smem:[#allocation3 + $0x1c]]
    %s152 = sld [smem:[#allocation3 + $0x1d]]
    %s153 = sld [smem:[#allocation3 + $0x1e]]
    %s154 = sld [smem:[#allocation3 + $0x1f]]
    %s155 = sld [smem:[#allocation3 + $0x20]]
    %s156 = sld [smem:[#allocation3 + $0x21]]
    %s157 = sld [smem:[#allocation3 + $0x22]]
    %s158 = sld [smem:[#allocation3 + $0x23]]
    %s159 = sld [smem:[#allocation3 + $0x24]]
    %s160 = sld [smem:[#allocation3 + $0x25]]
    %s161 = sld [smem:[#allocation3 + $0x26]]
    %s162 = sld [smem:[#allocation3 + $0x27]]
    %s163 = sld [smem:[#allocation3 + $0x28]]
    %s164 = sld [smem:[#allocation3 + $0x29]]
    %s165 = sld [smem:[#allocation3 + $0x2a]]
    %s166 = sld [smem:[#allocation3 + $0x2b]]
    %s167 = sld [smem:[#allocation3 + $0x2c]]
    %s168 = sld [smem:[#allocation3 + $0x2d]]
    %s169 = sld [smem:[#allocation3 + $0x2e]]
    %s170 = sld [smem:[#allocation3 + $0x2f]]
    %s171 = sld [smem:[#allocation3 + $0x30]]
    %s172 = sld [smem:[#allocation3 + $0x31]]
    %s173 = sld [smem:[#allocation3 + $0x32]]
    %s174 = sld [smem:[#allocation3 + $0x33]]
    %s175 = sld [smem:[#allocation3 + $0x34]]
    %s176 = sld [smem:[#allocation3 + $0x35]]
    %s177 = sld [smem:[#allocation3 + $0x36]]
    %s178 = sld [smem:[#allocation3 + $0x37]]
    %s179 = sld [smem:[#allocation3 + $0x38]]
    %s180 = sld [smem:[#allocation3 + $0x39]]
    %s181 = sld [smem:[#allocation3 + $0x3a]]
    %s182 = sld [smem:[#allocation3 + $0x3b]]
    %s183 = sld [smem:[#allocation3 + $0x3c]]
    %s184 = sld [smem:[#allocation3 + $0x3d]]
    %s185 = sld [smem:[#allocation3 + $0x3e]]
    %s186 = sld [smem:[#allocation3 + $0x3f]]
    %s187 = sld [smem:[#allocation3 + $0x40]]
    %s188 = sld [smem:[#allocation3 + $0x41]]
    %s189 = sld [smem:[#allocation3 + $0x42]]
    %s190 = sld [smem:[#allocation3 + $0x43]]
    %s191 = sld [smem:[#allocation3 + $0x44]]
    %s192 = sld [smem:[#allocation3 + $0x45]]
    %s193 = sld [smem:[#allocation3 + $0x46]]
    %s194 = sld [smem:[#allocation3 + $0x47]]
    %s195 = sld [smem:[#allocation3 + $0x48]]
    %s196 = sld [smem:[#allocation3 + $0x49]]
    %s197 = sld [smem:[#allocation3 + $0x4a]]
    %s198 = sld [smem:[#allocation3 + $0x4b]]
    %s199 = sld [smem:[#allocation3 + $0x4c]]
    %s200 = sld [smem:[#allocation3 + $0x4d]]
    %s201 = sld [smem:[#allocation3 + $0x4e]]
    %s202 = sld [smem:[#allocation3 + $0x4f]]
    %s203 = sld [smem:[#allocation3 + $0x50]]
    %s204 = sld [smem:[#allocation3 + $0x51]]
    %s205 = sld [smem:[#allocation3 + $0x52]]
    %s206 = sld [smem:[#allocation3 + $0x53]]
    %s207 = sld [smem:[#allocation3 + $0x54]]
    %s208 = sld [smem:[#allocation3 + $0x55]]
    %s209 = sld [smem:[#allocation3 + $0x56]]
    %s210 = sld [smem:[#allocation3 + $0x57]]
    %s211 = sld [smem:[#allocation3 + $0x58]]
    %s212 = sld [smem:[#allocation3 + $0x59]]
    %s213 = sld [smem:[#allocation3 + $0x5a]]
    %s214 = sld [smem:[#allocation3 + $0x5b]]
    %s215 = sld [smem:[#allocation3 + $0x5c]]
    %s216 = sld [smem:[#allocation3 + $0x5d]]
    %s217 = sld [smem:[#allocation3 + $0x5e]]
    %s218 = sld [smem:[#allocation3 + $0x5f]]
    %s219 = sld [smem:[#allocation3 + $0x60]]
    %s220 = sld [smem:[#allocation3 + $0x61]]
    %v221 = vstv %s123
    %v222 = vmul.f32 %v221, %v95
    %v223 = vmul.f32 %v221, %v96
    %v224 = vmul.f32 %v221, %v97
    %v225 = vmul.f32 %v221, %v98
    %v226 = vstv %s172
    %v227 = vmul.f32 %v226, %v104
    %v228 = vmul.f32 %v226, %v110
    %v229 = vmul.f32 %v226, %v116
    %v230 = vmul.f32 %v226, %v122
    %v231 = vadd.f32 %v222, %v227
    %v232 = vadd.f32 %v223, %v228
    %v233 = vadd.f32 %v224, %v229
    %v234 = vadd.f32 %v225, %v230
    %vm239 = vcmask 1041409
    %v240 = vsel %vm239, %v233, %v231
    %v241 = vsel %vm239, %v234, %v232
    %244 = vrot.lane.b32.xlu0 %v240, 51
    %v245 = vpop.permute.xlu0 %244
    %246 = vrot.lane.b32.xlu0 %v241, 51
    %v247 = vpop.permute.xlu0 %246
    %v248 = vlaneseq
    %v249 = vand.u32 %v248, 127
    %vm250 = vcmp.lt.s32.totalorder %v249, 51
    %v251 = vsel %vm250, %v245, %v247
    %v252 = vsel %vm250, %v247, %v245
    %v253 = vld [vmem:[#allocation4] ss:$8 sm:$0x3]
    %v255 = vlaneseq
    %v256 = vshrl.u32 %v255, 7
    %v257 = vsub.s32 0, %v256
    %v258 = vrot.slane %v253, %v257
    %v259 = vlaneseq
    %v260 = vshrl.u32 %v259, 7
    %v261 = vsub.s32 1, %v260
    %v262 = vrot.slane %v253, %v261
    %v265 = vmul.f32 %v252, %v258
    %v266 = vmul.f32 %v251, %v262
    %v267 = vadd.f32 %v265, 0.0
    %v268 = vadd.f32 %v266, 0.0
    %v269 = vstv %s124
    %v270 = vmul.f32 %v269, %v95
    %v271 = vmul.f32 %v269, %v96
    %v272 = vmul.f32 %v269, %v97
    %v273 = vmul.f32 %v269, %v98
    %v274 = vstv %s173
    %v275 = vmul.f32 %v274, %v104
    %v276 = vmul.f32 %v274, %v110
    %v277 = vmul.f32 %v274, %v116
    %v278 = vmul.f32 %v274, %v122
    %v279 = vadd.f32 %v270, %v275
    %v280 = vadd.f32 %v271, %v276
    %v281 = vadd.f32 %v272, %v277
    %v282 = vadd.f32 %v273, %v278
    %v287 = vsel %vm239, %v281, %v279
    %v288 = vsel %vm239, %v282, %v280
    %291 = vrot.lane.b32.xlu0 %v287, 50
    %v292 = vpop.permute.xlu0 %291
    %293 = vrot.lane.b32.xlu0 %v288, 50
    %v294 = vpop.permute.xlu0 %293
    %vm295 = vcmp.lt.s32.totalorder %v249, 50
    %v296 = vsel %vm295, %v292, %v294
    %v297 = vsel %vm295, %v294, %v292
    %s298 = scalar_lea.vmem [#allocation4], 1
    %v299 = vld [vmem:[%s298] ss:$8 sm:$0x3]
    %v301 = vlaneseq
    %v302 = vshrl.u32 %v301, 7
    %v303 = vsub.s32 0, %v302
    %v304 = vrot.slane %v299, %v303
    %v305 = vlaneseq
    %v306 = vshrl.u32 %v305, 7
    %v307 = vsub.s32 1, %v306
    %v308 = vrot.slane %v299, %v307
    %v311 = vmul.f32 %v297, %v304
    %v312 = vmul.f32 %v296, %v308
    %v313 = vadd.f32 %v267, %v311
    %v314 = vadd.f32 %v268, %v312
    %v315 = vstv %s125
    %v316 = vmul.f32 %v315, %v95
    %v317 = vmul.f32 %v315, %v96
    %v318 = vmul.f32 %v315, %v97
    %v319 = vmul.f32 %v315, %v98
    %v320 = vstv %s174
    %v321 = vmul.f32 %v320, %v104
    %v322 = vmul.f32 %v320, %v110
    %v323 = vmul.f32 %v320, %v116
    %v324 = vmul.f32 %v320, %v122
    %v325 = vadd.f32 %v316, %v321
    %v326 = vadd.f32 %v317, %v322
    %v327 = vadd.f32 %v318, %v323
    %v328 = vadd.f32 %v319, %v324
    %v333 = vsel %vm239, %v327, %v325
    %v334 = vsel %vm239, %v328, %v326
    %337 = vrot.lane.b32.xlu0 %v333, 49
    %v338 = vpop.permute.xlu0 %337
    %339 = vrot.lane.b32.xlu0 %v334, 49
    %v340 = vpop.permute.xlu0 %339
    %vm341 = vcmp.lt.s32.totalorder %v249, 49
    %v342 = vsel %vm341, %v338, %v340
    %v343 = vsel %vm341, %v340, %v338
    %s344 = scalar_lea.vmem [#allocation4], 2
    %v345 = vld [vmem:[%s344] ss:$8 sm:$0x3]
    %v347 = vlaneseq
    %v348 = vshrl.u32 %v347, 7
    %v349 = vsub.s32 0, %v348
    %v350 = vrot.slane %v345, %v349
    %v351 = vlaneseq
    %v352 = vshrl.u32 %v351, 7
    %v353 = vsub.s32 1, %v352
    %v354 = vrot.slane %v345, %v353
    %v357 = vmul.f32 %v343, %v350
    %v358 = vmul.f32 %v342, %v354
    %v359 = vadd.f32 %v313, %v357
    %v360 = vadd.f32 %v314, %v358
    %v361 = vstv %s126
    %v362 = vmul.f32 %v361, %v95
    %v363 = vmul.f32 %v361, %v96
    %v364 = vmul.f32 %v361, %v97
    %v365 = vmul.f32 %v361, %v98
    %v366 = vstv %s175
    %v367 = vmul.f32 %v366, %v104
    %v368 = vmul.f32 %v366, %v110
    %v369 = vmul.f32 %v366, %v116
    %v370 = vmul.f32 %v366, %v122
    %v371 = vadd.f32 %v362, %v367
    %v372 = vadd.f32 %v363, %v368
    %v373 = vadd.f32 %v364, %v369
    %v374 = vadd.f32 %v365, %v370
    %v379 = vsel %vm239, %v373, %v371
    %v380 = vsel %vm239, %v374, %v372
    %383 = vrot.lane.b32.xlu0 %v379, 48
    %v384 = vpop.permute.xlu0 %383
    %385 = vrot.lane.b32.xlu0 %v380, 48
    %v386 = vpop.permute.xlu0 %385
    %vm387 = vcmp.lt.s32.totalorder %v249, 48
    %v388 = vsel %vm387, %v384, %v386
    %v389 = vsel %vm387, %v386, %v384
    %s390 = scalar_lea.vmem [#allocation4], 3
    %v391 = vld [vmem:[%s390] ss:$8 sm:$0x3]
    %v393 = vlaneseq
    %v394 = vshrl.u32 %v393, 7
    %v395 = vsub.s32 0, %v394
    %v396 = vrot.slane %v391, %v395
    %v397 = vlaneseq
    %v398 = vshrl.u32 %v397, 7
    %v399 = vsub.s32 1, %v398
    %v400 = vrot.slane %v391, %v399
    %v403 = vmul.f32 %v389, %v396
    %v404 = vmul.f32 %v388, %v400
    %v405 = vadd.f32 %v359, %v403
    %v406 = vadd.f32 %v360, %v404
    %v407 = vstv %s127
    %v408 = vmul.f32 %v407, %v95
    %v409 = vmul.f32 %v407, %v96
    %v410 = vmul.f32 %v407, %v97
    %v411 = vmul.f32 %v407, %v98
    %v412 = vstv %s176
    %v413 = vmul.f32 %v412, %v104
    %v414 = vmul.f32 %v412, %v110
    %v415 = vmul.f32 %v412, %v116
    %v416 = vmul.f32 %v412, %v122
    %v417 = vadd.f32 %v408, %v413
    %v418 = vadd.f32 %v409, %v414
    %v419 = vadd.f32 %v410, %v415
    %v420 = vadd.f32 %v411, %v416
    %v425 = vsel %vm239, %v419, %v417
    %v426 = vsel %vm239, %v420, %v418
    %429 = vrot.lane.b32.xlu0 %v425, 47
    %v430 = vpop.permute.xlu0 %429
    %431 = vrot.lane.b32.xlu0 %v426, 47
    %v432 = vpop.permute.xlu0 %431
    %vm433 = vcmp.lt.s32.totalorder %v249, 47
    %v434 = vsel %vm433, %v430, %v432
    %v435 = vsel %vm433, %v432, %v430
    %s436 = scalar_lea.vmem [#allocation4], 4
    %v437 = vld [vmem:[%s436] ss:$8 sm:$0x3]
    %v439 = vlaneseq
    %v440 = vshrl.u32 %v439, 7
    %v441 = vsub.s32 0, %v440
    %v442 = vrot.slane %v437, %v441
    %v443 = vlaneseq
    %v444 = vshrl.u32 %v443, 7
    %v445 = vsub.s32 1, %v444
    %v446 = vrot.slane %v437, %v445
    %v449 = vmul.f32 %v435, %v442
    %v450 = vmul.f32 %v434, %v446
    %v451 = vadd.f32 %v405, %v449
    %v452 = vadd.f32 %v406, %v450
    %v453 = vstv %s128
    %v454 = vmul.f32 %v453, %v95
    %v455 = vmul.f32 %v453, %v96
    %v456 = vmul.f32 %v453, %v97
    %v457 = vmul.f32 %v453, %v98
    %v458 = vstv %s177
    %v459 = vmul.f32 %v458, %v104
    %v460 = vmul.f32 %v458, %v110
    %v461 = vmul.f32 %v458, %v116
    %v462 = vmul.f32 %v458, %v122
    %v463 = vadd.f32 %v454, %v459
    %v464 = vadd.f32 %v455, %v460
    %v465 = vadd.f32 %v456, %v461
    %v466 = vadd.f32 %v457, %v462
    %v471 = vsel %vm239, %v465, %v463
    %v472 = vsel %vm239, %v466, %v464
    %475 = vrot.lane.b32.xlu0 %v471, 46
    %v476 = vpop.permute.xlu0 %475
    %477 = vrot.lane.b32.xlu0 %v472, 46
    %v478 = vpop.permute.xlu0 %477
    %vm479 = vcmp.lt.s32.totalorder %v249, 46
    %v480 = vsel %vm479, %v476, %v478
    %v481 = vsel %vm479, %v478, %v476
    %s482 = scalar_lea.vmem [#allocation4], 5
    %v483 = vld [vmem:[%s482] ss:$8 sm:$0x3]
    %v485 = vlaneseq
    %v486 = vshrl.u32 %v485, 7
    %v487 = vsub.s32 0, %v486
    %v488 = vrot.slane %v483, %v487
    %v489 = vlaneseq
    %v490 = vshrl.u32 %v489, 7
    %v491 = vsub.s32 1, %v490
    %v492 = vrot.slane %v483, %v491
    %v495 = vmul.f32 %v481, %v488
    %v496 = vmul.f32 %v480, %v492
    %v497 = vadd.f32 %v451, %v495
    %v498 = vadd.f32 %v452, %v496
    %v499 = vstv %s129
    %v500 = vmul.f32 %v499, %v95
    %v501 = vmul.f32 %v499, %v96
    %v502 = vmul.f32 %v499, %v97
    %v503 = vmul.f32 %v499, %v98
    %v504 = vstv %s178
    %v505 = vmul.f32 %v504, %v104
    %v506 = vmul.f32 %v504, %v110
    %v507 = vmul.f32 %v504, %v116
    %v508 = vmul.f32 %v504, %v122
    %v509 = vadd.f32 %v500, %v505
    %v510 = vadd.f32 %v501, %v506
    %v511 = vadd.f32 %v502, %v507
    %v512 = vadd.f32 %v503, %v508
    %v517 = vsel %vm239, %v511, %v509
    %v518 = vsel %vm239, %v512, %v510
    %521 = vrot.lane.b32.xlu0 %v517, 45
    %v522 = vpop.permute.xlu0 %521
    %523 = vrot.lane.b32.xlu0 %v518, 45
    %v524 = vpop.permute.xlu0 %523
    %vm525 = vcmp.lt.s32.totalorder %v249, 45
    %v526 = vsel %vm525, %v522, %v524
    %v527 = vsel %vm525, %v524, %v522
    %s528 = scalar_lea.vmem [#allocation4], 6
    %v529 = vld [vmem:[%s528] ss:$8 sm:$0x3]
    %v531 = vlaneseq
    %v532 = vshrl.u32 %v531, 7
    %v533 = vsub.s32 0, %v532
    %v534 = vrot.slane %v529, %v533
    %v535 = vlaneseq
    %v536 = vshrl.u32 %v535, 7
    %v537 = vsub.s32 1, %v536
    %v538 = vrot.slane %v529, %v537
    %v541 = vmul.f32 %v527, %v534
    %v542 = vmul.f32 %v526, %v538
    %v543 = vadd.f32 %v497, %v541
    %v544 = vadd.f32 %v498, %v542
    %v545 = vstv %s130
    %v546 = vmul.f32 %v545, %v95
    %v547 = vmul.f32 %v545, %v96
    %v548 = vmul.f32 %v545, %v97
    %v549 = vmul.f32 %v545, %v98
    %v550 = vstv %s179
    %v551 = vmul.f32 %v550, %v104
    %v552 = vmul.f32 %v550, %v110
    %v553 = vmul.f32 %v550, %v116
    %v554 = vmul.f32 %v550, %v122
    %v555 = vadd.f32 %v546, %v551
    %v556 = vadd.f32 %v547, %v552
    %v557 = vadd.f32 %v548, %v553
    %v558 = vadd.f32 %v549, %v554
    %v563 = vsel %vm239, %v557, %v555
    %v564 = vsel %vm239, %v558, %v556
    %567 = vrot.lane.b32.xlu0 %v563, 35
    %v568 = vpop.permute.xlu0 %567
    %569 = vrot.lane.b32.xlu0 %v564, 35
    %v570 = vpop.permute.xlu0 %569
    %vm571 = vcmp.lt.s32.totalorder %v249, 35
    %v572 = vsel %vm571, %v568, %v570
    %v573 = vsel %vm571, %v570, %v568
    %s574 = scalar_lea.vmem [#allocation4], 7
    %v575 = vld [vmem:[%s574] ss:$8 sm:$0x3]
    %v577 = vlaneseq
    %v578 = vshrl.u32 %v577, 7
    %v579 = vsub.s32 0, %v578
    %v580 = vrot.slane %v575, %v579
    %v581 = vlaneseq
    %v582 = vshrl.u32 %v581, 7
    %v583 = vsub.s32 1, %v582
    %v584 = vrot.slane %v575, %v583
    %v587 = vmul.f32 %v573, %v580
    %v588 = vmul.f32 %v572, %v584
    %v589 = vadd.f32 %v543, %v587
    %v590 = vadd.f32 %v544, %v588
    %v591 = vstv %s131
    %v592 = vmul.f32 %v591, %v95
    %v593 = vmul.f32 %v591, %v96
    %v594 = vmul.f32 %v591, %v97
    %v595 = vmul.f32 %v591, %v98
    %v596 = vstv %s180
    %v597 = vmul.f32 %v596, %v104
    %v598 = vmul.f32 %v596, %v110
    %v599 = vmul.f32 %v596, %v116
    %v600 = vmul.f32 %v596, %v122
    %v601 = vadd.f32 %v592, %v597
    %v602 = vadd.f32 %v593, %v598
    %v603 = vadd.f32 %v594, %v599
    %v604 = vadd.f32 %v595, %v600
    %v609 = vsel %vm239, %v603, %v601
    %v610 = vsel %vm239, %v604, %v602
    %613 = vrot.lane.b32.xlu0 %v609, 34
    %v614 = vpop.permute.xlu0 %613
    %615 = vrot.lane.b32.xlu0 %v610, 34
    %v616 = vpop.permute.xlu0 %615
    %vm617 = vcmp.lt.s32.totalorder %v249, 34
    %v618 = vsel %vm617, %v614, %v616
    %v619 = vsel %vm617, %v616, %v614
    %s620 = scalar_lea.vmem [#allocation4], 16
    %v621 = vld [vmem:[%s620] ss:$8 sm:$0x3]
    %v623 = vlaneseq
    %v624 = vshrl.u32 %v623, 7
    %v625 = vsub.s32 0, %v624
    %v626 = vrot.slane %v621, %v625
    %v627 = vlaneseq
    %v628 = vshrl.u32 %v627, 7
    %v629 = vsub.s32 1, %v628
    %v630 = vrot.slane %v621, %v629
    %v633 = vmul.f32 %v619, %v626
    %v634 = vmul.f32 %v618, %v630
    %v635 = vadd.f32 %v589, %v633
    %v636 = vadd.f32 %v590, %v634
    %v637 = vstv %s132
    %v638 = vmul.f32 %v637, %v95
    %v639 = vmul.f32 %v637, %v96
    %v640 = vmul.f32 %v637, %v97
    %v641 = vmul.f32 %v637, %v98
    %v642 = vstv %s181
    %v643 = vmul.f32 %v642, %v104
    %v644 = vmul.f32 %v642, %v110
    %v645 = vmul.f32 %v642, %v116
    %v646 = vmul.f32 %v642, %v122
    %v647 = vadd.f32 %v638, %v643
    %v648 = vadd.f32 %v639, %v644
    %v649 = vadd.f32 %v640, %v645
    %v650 = vadd.f32 %v641, %v646
    %v655 = vsel %vm239, %v649, %v647
    %v656 = vsel %vm239, %v650, %v648
    %659 = vrot.lane.b32.xlu0 %v655, 33
    %v660 = vpop.permute.xlu0 %659
    %661 = vrot.lane.b32.xlu0 %v656, 33
    %v662 = vpop.permute.xlu0 %661
    %vm663 = vcmp.lt.s32.totalorder %v249, 33
    %v664 = vsel %vm663, %v660, %v662
    %v665 = vsel %vm663, %v662, %v660
    %s666 = scalar_lea.vmem [#allocation4], 17
    %v667 = vld [vmem:[%s666] ss:$8 sm:$0x3]
    %v669 = vlaneseq
    %v670 = vshrl.u32 %v669, 7
    %v671 = vsub.s32 0, %v670
    %v672 = vrot.slane %v667, %v671
    %v673 = vlaneseq
    %v674 = vshrl.u32 %v673, 7
    %v675 = vsub.s32 1, %v674
    %v676 = vrot.slane %v667, %v675
    %v679 = vmul.f32 %v665, %v672
    %v680 = vmul.f32 %v664, %v676
    %v681 = vadd.f32 %v635, %v679
    %v682 = vadd.f32 %v636, %v680
    %v683 = vstv %s133
    %v684 = vmul.f32 %v683, %v95
    %v685 = vmul.f32 %v683, %v96
    %v686 = vmul.f32 %v683, %v97
    %v687 = vmul.f32 %v683, %v98
    %v688 = vstv %s182
    %v689 = vmul.f32 %v688, %v104
    %v690 = vmul.f32 %v688, %v110
    %v691 = vmul.f32 %v688, %v116
    %v692 = vmul.f32 %v688, %v122
    %v693 = vadd.f32 %v684, %v689
    %v694 = vadd.f32 %v685, %v690
    %v695 = vadd.f32 %v686, %v691
    %v696 = vadd.f32 %v687, %v692
    %v701 = vsel %vm239, %v695, %v693
    %v702 = vsel %vm239, %v696, %v694
    %705 = vrot.lane.b32.xlu0 %v701, 32
    %v706 = vpop.permute.xlu0 %705
    %707 = vrot.lane.b32.xlu0 %v702, 32
    %v708 = vpop.permute.xlu0 %707
    %vm709 = vcmp.lt.s32.totalorder %v249, 32
    %v710 = vsel %vm709, %v706, %v708
    %v711 = vsel %vm709, %v708, %v706
    %s712 = scalar_lea.vmem [#allocation4], 18
    %v713 = vld [vmem:[%s712] ss:$8 sm:$0x3]
    %v715 = vlaneseq
    %v716 = vshrl.u32 %v715, 7
    %v717 = vsub.s32 0, %v716
    %v718 = vrot.slane %v713, %v717
    %v719 = vlaneseq
    %v720 = vshrl.u32 %v719, 7
    %v721 = vsub.s32 1, %v720
    %v722 = vrot.slane %v713, %v721
    %v725 = vmul.f32 %v711, %v718
    %v726 = vmul.f32 %v710, %v722
    %v727 = vadd.f32 %v681, %v725
    %v728 = vadd.f32 %v682, %v726
    %v729 = vstv %s134
    %v730 = vmul.f32 %v729, %v95
    %v731 = vmul.f32 %v729, %v96
    %v732 = vmul.f32 %v729, %v97
    %v733 = vmul.f32 %v729, %v98
    %v734 = vstv %s183
    %v735 = vmul.f32 %v734, %v104
    %v736 = vmul.f32 %v734, %v110
    %v737 = vmul.f32 %v734, %v116
    %v738 = vmul.f32 %v734, %v122
    %v739 = vadd.f32 %v730, %v735
    %v740 = vadd.f32 %v731, %v736
    %v741 = vadd.f32 %v732, %v737
    %v742 = vadd.f32 %v733, %v738
    %v747 = vsel %vm239, %v741, %v739
    %v748 = vsel %vm239, %v742, %v740
    %751 = vrot.lane.b32.xlu0 %v747, 31
    %v752 = vpop.permute.xlu0 %751
    %753 = vrot.lane.b32.xlu0 %v748, 31
    %v754 = vpop.permute.xlu0 %753
    %vm755 = vcmp.lt.s32.totalorder %v249, 31
    %v756 = vsel %vm755, %v752, %v754
    %v757 = vsel %vm755, %v754, %v752
    %s758 = scalar_lea.vmem [#allocation4], 19
    %v759 = vld [vmem:[%s758] ss:$8 sm:$0x3]
    %v761 = vlaneseq
    %v762 = vshrl.u32 %v761, 7
    %v763 = vsub.s32 0, %v762
    %v764 = vrot.slane %v759, %v763
    %v765 = vlaneseq
    %v766 = vshrl.u32 %v765, 7
    %v767 = vsub.s32 1, %v766
    %v768 = vrot.slane %v759, %v767
    %v771 = vmul.f32 %v757, %v764
    %v772 = vmul.f32 %v756, %v768
    %v773 = vadd.f32 %v727, %v771
    %v774 = vadd.f32 %v728, %v772
    %v775 = vstv %s135
    %v776 = vmul.f32 %v775, %v95
    %v777 = vmul.f32 %v775, %v96
    %v778 = vmul.f32 %v775, %v97
    %v779 = vmul.f32 %v775, %v98
    %v780 = vstv %s184
    %v781 = vmul.f32 %v780, %v104
    %v782 = vmul.f32 %v780, %v110
    %v783 = vmul.f32 %v780, %v116
    %v784 = vmul.f32 %v780, %v122
    %v785 = vadd.f32 %v776, %v781
    %v786 = vadd.f32 %v777, %v782
    %v787 = vadd.f32 %v778, %v783
    %v788 = vadd.f32 %v779, %v784
    %v793 = vsel %vm239, %v787, %v785
    %v794 = vsel %vm239, %v788, %v786
    %797 = vrot.lane.b32.xlu0 %v793, 30
    %v798 = vpop.permute.xlu0 %797
    %799 = vrot.lane.b32.xlu0 %v794, 30
    %v800 = vpop.permute.xlu0 %799
    %vm801 = vcmp.lt.s32.totalorder %v249, 30
    %v802 = vsel %vm801, %v798, %v800
    %v803 = vsel %vm801, %v800, %v798
    %s804 = scalar_lea.vmem [#allocation4], 20
    %v805 = vld [vmem:[%s804] ss:$8 sm:$0x3]
    %v807 = vlaneseq
    %v808 = vshrl.u32 %v807, 7
    %v809 = vsub.s32 0, %v808
    %v810 = vrot.slane %v805, %v809
    %v811 = vlaneseq
    %v812 = vshrl.u32 %v811, 7
    %v813 = vsub.s32 1, %v812
    %v814 = vrot.slane %v805, %v813
    %v817 = vmul.f32 %v803, %v810
    %v818 = vmul.f32 %v802, %v814
    %v819 = vadd.f32 %v773, %v817
    %v820 = vadd.f32 %v774, %v818
    %v821 = vstv %s136
    %v822 = vmul.f32 %v821, %v95
    %v823 = vmul.f32 %v821, %v96
    %v824 = vmul.f32 %v821, %v97
    %v825 = vmul.f32 %v821, %v98
    %v826 = vstv %s185
    %v827 = vmul.f32 %v826, %v104
    %v828 = vmul.f32 %v826, %v110
    %v829 = vmul.f32 %v826, %v116
    %v830 = vmul.f32 %v826, %v122
    %v831 = vadd.f32 %v822, %v827
    %v832 = vadd.f32 %v823, %v828
    %v833 = vadd.f32 %v824, %v829
    %v834 = vadd.f32 %v825, %v830
    %v839 = vsel %vm239, %v833, %v831
    %v840 = vsel %vm239, %v834, %v832
    %843 = vrot.lane.b32.xlu0 %v839, 29
    %v844 = vpop.permute.xlu0 %843
    %845 = vrot.lane.b32.xlu0 %v840, 29
    %v846 = vpop.permute.xlu0 %845
    %vm847 = vcmp.lt.s32.totalorder %v249, 29
    %v848 = vsel %vm847, %v844, %v846
    %v849 = vsel %vm847, %v846, %v844
    %s850 = scalar_lea.vmem [#allocation4], 21
    %v851 = vld [vmem:[%s850] ss:$8 sm:$0x3]
    %v853 = vlaneseq
    %v854 = vshrl.u32 %v853, 7
    %v855 = vsub.s32 0, %v854
    %v856 = vrot.slane %v851, %v855
    %v857 = vlaneseq
    %v858 = vshrl.u32 %v857, 7
    %v859 = vsub.s32 1, %v858
    %v860 = vrot.slane %v851, %v859
    %v863 = vmul.f32 %v849, %v856
    %v864 = vmul.f32 %v848, %v860
    %v865 = vadd.f32 %v819, %v863
    %v866 = vadd.f32 %v820, %v864
    %v867 = vstv %s137
    %v868 = vmul.f32 %v867, %v95
    %v869 = vmul.f32 %v867, %v96
    %v870 = vmul.f32 %v867, %v97
    %v871 = vmul.f32 %v867, %v98
    %v872 = vstv %s186
    %v873 = vmul.f32 %v872, %v104
    %v874 = vmul.f32 %v872, %v110
    %v875 = vmul.f32 %v872, %v116
    %v876 = vmul.f32 %v872, %v122
    %v877 = vadd.f32 %v868, %v873
    %v878 = vadd.f32 %v869, %v874
    %v879 = vadd.f32 %v870, %v875
    %v880 = vadd.f32 %v871, %v876
    %v885 = vsel %vm239, %v879, %v877
    %v886 = vsel %vm239, %v880, %v878
    %889 = vrot.lane.b32.xlu0 %v885, 19
    %v890 = vpop.permute.xlu0 %889
    %891 = vrot.lane.b32.xlu0 %v886, 19
    %v892 = vpop.permute.xlu0 %891
    %vm893 = vcmp.lt.s32.totalorder %v249, 19
    %v894 = vsel %vm893, %v890, %v892
    %v895 = vsel %vm893, %v892, %v890
    %s896 = scalar_lea.vmem [#allocation4], 22
    %v897 = vld [vmem:[%s896] ss:$8 sm:$0x3]
    %v899 = vlaneseq
    %v900 = vshrl.u32 %v899, 7
    %v901 = vsub.s32 0, %v900
    %v902 = vrot.slane %v897, %v901
    %v903 = vlaneseq
    %v904 = vshrl.u32 %v903, 7
    %v905 = vsub.s32 1, %v904
    %v906 = vrot.slane %v897, %v905
    %v909 = vmul.f32 %v895, %v902
    %v910 = vmul.f32 %v894, %v906
    %v911 = vadd.f32 %v865, %v909
    %v912 = vadd.f32 %v866, %v910
    %v913 = vstv %s138
    %v914 = vmul.f32 %v913, %v95
    %v915 = vmul.f32 %v913, %v96
    %v916 = vmul.f32 %v913, %v97
    %v917 = vmul.f32 %v913, %v98
    %v918 = vstv %s187
    %v919 = vmul.f32 %v918, %v104
    %v920 = vmul.f32 %v918, %v110
    %v921 = vmul.f32 %v918, %v116
    %v922 = vmul.f32 %v918, %v122
    %v923 = vadd.f32 %v914, %v919
    %v924 = vadd.f32 %v915, %v920
    %v925 = vadd.f32 %v916, %v921
    %v926 = vadd.f32 %v917, %v922
    %v931 = vsel %vm239, %v925, %v923
    %v932 = vsel %vm239, %v926, %v924
    %935 = vrot.lane.b32.xlu0 %v931, 18
    %v936 = vpop.permute.xlu0 %935
    %937 = vrot.lane.b32.xlu0 %v932, 18
    %v938 = vpop.permute.xlu0 %937
    %vm939 = vcmp.lt.s32.totalorder %v249, 18
    %v940 = vsel %vm939, %v936, %v938
    %v941 = vsel %vm939, %v938, %v936
    %s942 = scalar_lea.vmem [#allocation4], 23
    %v943 = vld [vmem:[%s942] ss:$8 sm:$0x3]
    %v945 = vlaneseq
    %v946 = vshrl.u32 %v945, 7
    %v947 = vsub.s32 0, %v946
    %v948 = vrot.slane %v943, %v947
    %v949 = vlaneseq
    %v950 = vshrl.u32 %v949, 7
    %v951 = vsub.s32 1, %v950
    %v952 = vrot.slane %v943, %v951
    %v955 = vmul.f32 %v941, %v948
    %v956 = vmul.f32 %v940, %v952
    %v957 = vadd.f32 %v911, %v955
    %v958 = vadd.f32 %v912, %v956
    %v959 = vstv %s139
    %v960 = vmul.f32 %v959, %v95
    %v961 = vmul.f32 %v959, %v96
    %v962 = vmul.f32 %v959, %v97
    %v963 = vmul.f32 %v959, %v98
    %v964 = vstv %s188
    %v965 = vmul.f32 %v964, %v104
    %v966 = vmul.f32 %v964, %v110
    %v967 = vmul.f32 %v964, %v116
    %v968 = vmul.f32 %v964, %v122
    %v969 = vadd.f32 %v960, %v965
    %v970 = vadd.f32 %v961, %v966
    %v971 = vadd.f32 %v962, %v967
    %v972 = vadd.f32 %v963, %v968
    %v977 = vsel %vm239, %v971, %v969
    %v978 = vsel %vm239, %v972, %v970
    %981 = vrot.lane.b32.xlu0 %v977, 17
    %v982 = vpop.permute.xlu0 %981
    %983 = vrot.lane.b32.xlu0 %v978, 17
    %v984 = vpop.permute.xlu0 %983
    %vm985 = vcmp.lt.s32.totalorder %v249, 17
    %v986 = vsel %vm985, %v982, %v984
    %v987 = vsel %vm985, %v984, %v982
    %s988 = scalar_lea.vmem [#allocation4], 32
    %v989 = vld [vmem:[%s988] ss:$8 sm:$0x3]
    %v991 = vlaneseq
    %v992 = vshrl.u32 %v991, 7
    %v993 = vsub.s32 0, %v992
    %v994 = vrot.slane %v989, %v993
    %v995 = vlaneseq
    %v996 = vshrl.u32 %v995, 7
    %v997 = vsub.s32 1, %v996
    %v998 = vrot.slane %v989, %v997
    %v1001 = vmul.f32 %v987, %v994
    %v1002 = vmul.f32 %v986, %v998
    %v1003 = vadd.f32 %v957, %v1001
    %v1004 = vadd.f32 %v958, %v1002
    %v1005 = vstv %s140
    %v1006 = vmul.f32 %v1005, %v95
    %v1007 = vmul.f32 %v1005, %v96
    %v1008 = vmul.f32 %v1005, %v97
    %v1009 = vmul.f32 %v1005, %v98
    %v1010 = vstv %s189
    %v1011 = vmul.f32 %v1010, %v104
    %v1012 = vmul.f32 %v1010, %v110
    %v1013 = vmul.f32 %v1010, %v116
    %v1014 = vmul.f32 %v1010, %v122
    %v1015 = vadd.f32 %v1006, %v1011
    %v1016 = vadd.f32 %v1007, %v1012
    %v1017 = vadd.f32 %v1008, %v1013
    %v1018 = vadd.f32 %v1009, %v1014
    %v1023 = vsel %vm239, %v1017, %v1015
    %v1024 = vsel %vm239, %v1018, %v1016
    %1027 = vrot.lane.b32.xlu0 %v1023, 16
    %v1028 = vpop.permute.xlu0 %1027
    %1029 = vrot.lane.b32.xlu0 %v1024, 16
    %v1030 = vpop.permute.xlu0 %1029
    %vm1031 = vcmp.lt.s32.totalorder %v249, 16
    %v1032 = vsel %vm1031, %v1028, %v1030
    %v1033 = vsel %vm1031, %v1030, %v1028
    %s1034 = scalar_lea.vmem [#allocation4], 33
    %v1035 = vld [vmem:[%s1034] ss:$8 sm:$0x3]
    %v1037 = vlaneseq
    %v1038 = vshrl.u32 %v1037, 7
    %v1039 = vsub.s32 0, %v1038
    %v1040 = vrot.slane %v1035, %v1039
    %v1041 = vlaneseq
    %v1042 = vshrl.u32 %v1041, 7
    %v1043 = vsub.s32 1, %v1042
    %v1044 = vrot.slane %v1035, %v1043
    %v1047 = vmul.f32 %v1033, %v1040
    %v1048 = vmul.f32 %v1032, %v1044
    %v1049 = vadd.f32 %v1003, %v1047
    %v1050 = vadd.f32 %v1004, %v1048
    %v1051 = vstv %s141
    %v1052 = vmul.f32 %v1051, %v95
    %v1053 = vmul.f32 %v1051, %v96
    %v1054 = vmul.f32 %v1051, %v97
    %v1055 = vmul.f32 %v1051, %v98
    %v1056 = vstv %s190
    %v1057 = vmul.f32 %v1056, %v104
    %v1058 = vmul.f32 %v1056, %v110
    %v1059 = vmul.f32 %v1056, %v116
    %v1060 = vmul.f32 %v1056, %v122
    %v1061 = vadd.f32 %v1052, %v1057
    %v1062 = vadd.f32 %v1053, %v1058
    %v1063 = vadd.f32 %v1054, %v1059
    %v1064 = vadd.f32 %v1055, %v1060
    %v1069 = vsel %vm239, %v1063, %v1061
    %v1070 = vsel %vm239, %v1064, %v1062
    %1073 = vrot.lane.b32.xlu0 %v1069, 15
    %v1074 = vpop.permute.xlu0 %1073
    %1075 = vrot.lane.b32.xlu0 %v1070, 15
    %v1076 = vpop.permute.xlu0 %1075
    %vm1077 = vcmp.lt.s32.totalorder %v249, 15
    %v1078 = vsel %vm1077, %v1074, %v1076
    %v1079 = vsel %vm1077, %v1076, %v1074
    %s1080 = scalar_lea.vmem [#allocation4], 34
    %v1081 = vld [vmem:[%s1080] ss:$8 sm:$0x3]
    %v1083 = vlaneseq
    %v1084 = vshrl.u32 %v1083, 7
    %v1085 = vsub.s32 0, %v1084
    %v1086 = vrot.slane %v1081, %v1085
    %v1087 = vlaneseq
    %v1088 = vshrl.u32 %v1087, 7
    %v1089 = vsub.s32 1, %v1088
    %v1090 = vrot.slane %v1081, %v1089
    %v1093 = vmul.f32 %v1079, %v1086
    %v1094 = vmul.f32 %v1078, %v1090
    %v1095 = vadd.f32 %v1049, %v1093
    %v1096 = vadd.f32 %v1050, %v1094
    %v1097 = vstv %s142
    %v1098 = vmul.f32 %v1097, %v95
    %v1099 = vmul.f32 %v1097, %v96
    %v1100 = vmul.f32 %v1097, %v97
    %v1101 = vmul.f32 %v1097, %v98
    %v1102 = vstv %s191
    %v1103 = vmul.f32 %v1102, %v104
    %v1104 = vmul.f32 %v1102, %v110
    %v1105 = vmul.f32 %v1102, %v116
    %v1106 = vmul.f32 %v1102, %v122
    %v1107 = vadd.f32 %v1098, %v1103
    %v1108 = vadd.f32 %v1099, %v1104
    %v1109 = vadd.f32 %v1100, %v1105
    %v1110 = vadd.f32 %v1101, %v1106
    %v1115 = vsel %vm239, %v1109, %v1107
    %v1116 = vsel %vm239, %v1110, %v1108
    %1119 = vrot.lane.b32.xlu0 %v1115, 14
    %v1120 = vpop.permute.xlu0 %1119
    %1121 = vrot.lane.b32.xlu0 %v1116, 14
    %v1122 = vpop.permute.xlu0 %1121
    %vm1123 = vcmp.lt.s32.totalorder %v249, 14
    %v1124 = vsel %vm1123, %v1120, %v1122
    %v1125 = vsel %vm1123, %v1122, %v1120
    %s1126 = scalar_lea.vmem [#allocation4], 35
    %v1127 = vld [vmem:[%s1126] ss:$8 sm:$0x3]
    %v1129 = vlaneseq
    %v1130 = vshrl.u32 %v1129, 7
    %v1131 = vsub.s32 0, %v1130
    %v1132 = vrot.slane %v1127, %v1131
    %v1133 = vlaneseq
    %v1134 = vshrl.u32 %v1133, 7
    %v1135 = vsub.s32 1, %v1134
    %v1136 = vrot.slane %v1127, %v1135
    %v1139 = vmul.f32 %v1125, %v1132
    %v1140 = vmul.f32 %v1124, %v1136
    %v1141 = vadd.f32 %v1095, %v1139
    %v1142 = vadd.f32 %v1096, %v1140
    %v1143 = vstv %s143
    %v1144 = vmul.f32 %v1143, %v95
    %v1145 = vmul.f32 %v1143, %v96
    %v1146 = vmul.f32 %v1143, %v97
    %v1147 = vmul.f32 %v1143, %v98
    %v1148 = vstv %s192
    %v1149 = vmul.f32 %v1148, %v104
    %v1150 = vmul.f32 %v1148, %v110
    %v1151 = vmul.f32 %v1148, %v116
    %v1152 = vmul.f32 %v1148, %v122
    %v1153 = vadd.f32 %v1144, %v1149
    %v1154 = vadd.f32 %v1145, %v1150
    %v1155 = vadd.f32 %v1146, %v1151
    %v1156 = vadd.f32 %v1147, %v1152
    %v1161 = vsel %vm239, %v1155, %v1153
    %v1162 = vsel %vm239, %v1156, %v1154
    %1165 = vrot.lane.b32.xlu0 %v1161, 13
    %v1166 = vpop.permute.xlu0 %1165
    %1167 = vrot.lane.b32.xlu0 %v1162, 13
    %v1168 = vpop.permute.xlu0 %1167
    %vm1169 = vcmp.lt.s32.totalorder %v249, 13
    %v1170 = vsel %vm1169, %v1166, %v1168
    %v1171 = vsel %vm1169, %v1168, %v1166
    %s1172 = scalar_lea.vmem [#allocation4], 36
    %v1173 = vld [vmem:[%s1172] ss:$8 sm:$0x3]
    %v1175 = vlaneseq
    %v1176 = vshrl.u32 %v1175, 7
    %v1177 = vsub.s32 0, %v1176
    %v1178 = vrot.slane %v1173, %v1177
    %v1179 = vlaneseq
    %v1180 = vshrl.u32 %v1179, 7
    %v1181 = vsub.s32 1, %v1180
    %v1182 = vrot.slane %v1173, %v1181
    %v1185 = vmul.f32 %v1171, %v1178
    %v1186 = vmul.f32 %v1170, %v1182
    %v1187 = vadd.f32 %v1141, %v1185
    %v1188 = vadd.f32 %v1142, %v1186
    %v1189 = vstv %s144
    %v1190 = vmul.f32 %v1189, %v95
    %v1191 = vmul.f32 %v1189, %v96
    %v1192 = vmul.f32 %v1189, %v97
    %v1193 = vmul.f32 %v1189, %v98
    %v1194 = vstv %s193
    %v1195 = vmul.f32 %v1194, %v104
    %v1196 = vmul.f32 %v1194, %v110
    %v1197 = vmul.f32 %v1194, %v116
    %v1198 = vmul.f32 %v1194, %v122
    %v1199 = vadd.f32 %v1190, %v1195
    %v1200 = vadd.f32 %v1191, %v1196
    %v1201 = vadd.f32 %v1192, %v1197
    %v1202 = vadd.f32 %v1193, %v1198
    %v1207 = vsel %vm239, %v1201, %v1199
    %v1208 = vsel %vm239, %v1202, %v1200
    %1211 = vrot.lane.b32.xlu0 %v1207, 3
    %v1212 = vpop.permute.xlu0 %1211
    %1213 = vrot.lane.b32.xlu0 %v1208, 3
    %v1214 = vpop.permute.xlu0 %1213
    %vm1215 = vcmp.lt.s32.totalorder %v249, 3
    %v1216 = vsel %vm1215, %v1212, %v1214
    %v1217 = vsel %vm1215, %v1214, %v1212
    %s1218 = scalar_lea.vmem [#allocation4], 37
    %v1219 = vld [vmem:[%s1218] ss:$8 sm:$0x3]
    %v1221 = vlaneseq
    %v1222 = vshrl.u32 %v1221, 7
    %v1223 = vsub.s32 0, %v1222
    %v1224 = vrot.slane %v1219, %v1223
    %v1225 = vlaneseq
    %v1226 = vshrl.u32 %v1225, 7
    %v1227 = vsub.s32 1, %v1226
    %v1228 = vrot.slane %v1219, %v1227
    %v1231 = vmul.f32 %v1217, %v1224
    %v1232 = vmul.f32 %v1216, %v1228
    %v1233 = vadd.f32 %v1187, %v1231
    %v1234 = vadd.f32 %v1188, %v1232
    %v1235 = vstv %s145
    %v1236 = vmul.f32 %v1235, %v95
    %v1237 = vmul.f32 %v1235, %v96
    %v1238 = vmul.f32 %v1235, %v97
    %v1239 = vmul.f32 %v1235, %v98
    %v1240 = vstv %s194
    %v1241 = vmul.f32 %v1240, %v104
    %v1242 = vmul.f32 %v1240, %v110
    %v1243 = vmul.f32 %v1240, %v116
    %v1244 = vmul.f32 %v1240, %v122
    %v1245 = vadd.f32 %v1236, %v1241
    %v1246 = vadd.f32 %v1237, %v1242
    %v1247 = vadd.f32 %v1238, %v1243
    %v1248 = vadd.f32 %v1239, %v1244
    %v1253 = vsel %vm239, %v1247, %v1245
    %v1254 = vsel %vm239, %v1248, %v1246
    %1257 = vrot.lane.b32.xlu0 %v1253, 2
    %v1258 = vpop.permute.xlu0 %1257
    %1259 = vrot.lane.b32.xlu0 %v1254, 2
    %v1260 = vpop.permute.xlu0 %1259
    %vm1261 = vcmp.lt.s32.totalorder %v249, 2
    %v1262 = vsel %vm1261, %v1258, %v1260
    %v1263 = vsel %vm1261, %v1260, %v1258
    %s1264 = scalar_lea.vmem [#allocation4], 38
    %v1265 = vld [vmem:[%s1264] ss:$8 sm:$0x3]
    %v1267 = vlaneseq
    %v1268 = vshrl.u32 %v1267, 7
    %v1269 = vsub.s32 0, %v1268
    %v1270 = vrot.slane %v1265, %v1269
    %v1271 = vlaneseq
    %v1272 = vshrl.u32 %v1271, 7
    %v1273 = vsub.s32 1, %v1272
    %v1274 = vrot.slane %v1265, %v1273
    %v1277 = vmul.f32 %v1263, %v1270
    %v1278 = vmul.f32 %v1262, %v1274
    %v1279 = vadd.f32 %v1233, %v1277
    %v1280 = vadd.f32 %v1234, %v1278
    %v1281 = vstv %s146
    %v1282 = vmul.f32 %v1281, %v95
    %v1283 = vmul.f32 %v1281, %v96
    %v1284 = vmul.f32 %v1281, %v97
    %v1285 = vmul.f32 %v1281, %v98
    %v1286 = vstv %s195
    %v1287 = vmul.f32 %v1286, %v104
    %v1288 = vmul.f32 %v1286, %v110
    %v1289 = vmul.f32 %v1286, %v116
    %v1290 = vmul.f32 %v1286, %v122
    %v1291 = vadd.f32 %v1282, %v1287
    %v1292 = vadd.f32 %v1283, %v1288
    %v1293 = vadd.f32 %v1284, %v1289
    %v1294 = vadd.f32 %v1285, %v1290
    %v1299 = vsel %vm239, %v1293, %v1291
    %v1300 = vsel %vm239, %v1294, %v1292
    %1303 = vrot.lane.b32.xlu0 %v1299, 1
    %v1304 = vpop.permute.xlu0 %1303
    %1305 = vrot.lane.b32.xlu0 %v1300, 1
    %v1306 = vpop.permute.xlu0 %1305
    %vm1307 = vcmp.lt.s32.totalorder %v249, 1
    %v1308 = vsel %vm1307, %v1304, %v1306
    %v1309 = vsel %vm1307, %v1306, %v1304
    %s1310 = scalar_lea.vmem [#allocation4], 39
    %v1311 = vld [vmem:[%s1310] ss:$8 sm:$0x3]
    %v1313 = vlaneseq
    %v1314 = vshrl.u32 %v1313, 7
    %v1315 = vsub.s32 0, %v1314
    %v1316 = vrot.slane %v1311, %v1315
    %v1317 = vlaneseq
    %v1318 = vshrl.u32 %v1317, 7
    %v1319 = vsub.s32 1, %v1318
    %v1320 = vrot.slane %v1311, %v1319
    %v1323 = vmul.f32 %v1309, %v1316
    %v1324 = vmul.f32 %v1308, %v1320
    %v1325 = vadd.f32 %v1279, %v1323
    %v1326 = vadd.f32 %v1280, %v1324
    %v1327 = vstv %s147
    %v1328 = vmul.f32 %v1327, %v95
    %v1329 = vmul.f32 %v1327, %v96
    %v1330 = vmul.f32 %v1327, %v97
    %v1331 = vmul.f32 %v1327, %v98
    %v1332 = vstv %s196
    %v1333 = vmul.f32 %v1332, %v104
    %v1334 = vmul.f32 %v1332, %v110
    %v1335 = vmul.f32 %v1332, %v116
    %v1336 = vmul.f32 %v1332, %v122
    %v1337 = vadd.f32 %v1328, %v1333
    %v1338 = vadd.f32 %v1329, %v1334
    %v1339 = vadd.f32 %v1330, %v1335
    %v1340 = vadd.f32 %v1331, %v1336
    %s1341 = scalar_lea.vmem [#allocation4], 48
    %v1342 = vld [vmem:[%s1341] ss:$8 sm:$0x3]
    %v1344 = vlaneseq
    %v1345 = vshrl.u32 %v1344, 7
    %v1346 = vsub.s32 0, %v1345
    %v1347 = vrot.slane %v1342, %v1346
    %v1348 = vlaneseq
    %v1349 = vshrl.u32 %v1348, 7
    %v1350 = vsub.s32 1, %v1349
    %v1351 = vrot.slane %v1342, %v1350
    %v1354 = vmul.f32 %v1337, %v1347
    %v1355 = vmul.f32 %v1338, %v1351
    %v1356 = vmul.f32 %v1339, %v1347
    %v1357 = vmul.f32 %v1340, %v1351
    %v1362 = vrot.slane %v1356, 7
    %v1363 = vsel %vm239, %v1362, %v1354
    %v1364 = vrot.slane %v1357, 7
    %v1365 = vsel %vm239, %v1364, %v1355
    %v1368 = vadd.f32 %v1325, %v1363
    %v1369 = vadd.f32 %v1326, %v1365
    %v1370 = vstv %s148
    %v1371 = vmul.f32 %v1370, %v95
    %v1372 = vmul.f32 %v1370, %v96
    %v1373 = vmul.f32 %v1370, %v97
    %v1374 = vmul.f32 %v1370, %v98
    %v1375 = vstv %s197
    %v1376 = vmul.f32 %v1375, %v104
    %v1377 = vmul.f32 %v1375, %v110
    %v1378 = vmul.f32 %v1375, %v116
    %v1379 = vmul.f32 %v1375, %v122
    %v1380 = vadd.f32 %v1371, %v1376
    %v1381 = vadd.f32 %v1372, %v1377
    %v1382 = vadd.f32 %v1373, %v1378
    %v1383 = vadd.f32 %v1374, %v1379
    %v1388 = vsel %vm239, %v1382, %v1380
    %v1389 = vsel %vm239, %v1383, %v1381
    %1392 = vrot.lane.b32.xlu0 %v1388, 127
    %v1393 = vpop.permute.xlu0 %1392
    %1394 = vrot.lane.b32.xlu0 %v1389, 127
    %v1395 = vpop.permute.xlu0 %1394
    %vm1396 = vcmp.lt.s32.totalorder %v249, 127
    %v1397 = vsel %vm1396, %v1393, %v1395
    %v1398 = vsel %vm1396, %v1395, %v1393
    %s1399 = scalar_lea.vmem [#allocation4], 49
    %v1400 = vld [vmem:[%s1399] ss:$8 sm:$0x3]
    %v1402 = vlaneseq
    %v1403 = vshrl.u32 %v1402, 7
    %v1404 = vsub.s32 0, %v1403
    %v1405 = vrot.slane %v1400, %v1404
    %v1406 = vlaneseq
    %v1407 = vshrl.u32 %v1406, 7
    %v1408 = vsub.s32 1, %v1407
    %v1409 = vrot.slane %v1400, %v1408
    %v1412 = vmul.f32 %v1397, %v1405
    %v1413 = vmul.f32 %v1398, %v1409
    %v1414 = vadd.f32 %v1368, %v1412
    %v1415 = vadd.f32 %v1369, %v1413
    %v1416 = vstv %s149
    %v1417 = vmul.f32 %v1416, %v95
    %v1418 = vmul.f32 %v1416, %v96
    %v1419 = vmul.f32 %v1416, %v97
    %v1420 = vmul.f32 %v1416, %v98
    %v1421 = vstv %s198
    %v1422 = vmul.f32 %v1421, %v104
    %v1423 = vmul.f32 %v1421, %v110
    %v1424 = vmul.f32 %v1421, %v116
    %v1425 = vmul.f32 %v1421, %v122
    %v1426 = vadd.f32 %v1417, %v1422
    %v1427 = vadd.f32 %v1418, %v1423
    %v1428 = vadd.f32 %v1419, %v1424
    %v1429 = vadd.f32 %v1420, %v1425
    %v1434 = vsel %vm239, %v1428, %v1426
    %v1435 = vsel %vm239, %v1429, %v1427
    %1438 = vrot.lane.b32.xlu0 %v1434, 126
    %v1439 = vpop.permute.xlu0 %1438
    %1440 = vrot.lane.b32.xlu0 %v1435, 126
    %v1441 = vpop.permute.xlu0 %1440
    %vm1442 = vcmp.lt.s32.totalorder %v249, 126
    %v1443 = vsel %vm1442, %v1439, %v1441
    %v1444 = vsel %vm1442, %v1441, %v1439
    %s1445 = scalar_lea.vmem [#allocation4], 50
    %v1446 = vld [vmem:[%s1445] ss:$8 sm:$0x3]
    %v1448 = vlaneseq
    %v1449 = vshrl.u32 %v1448, 7
    %v1450 = vsub.s32 0, %v1449
    %v1451 = vrot.slane %v1446, %v1450
    %v1452 = vlaneseq
    %v1453 = vshrl.u32 %v1452, 7
    %v1454 = vsub.s32 1, %v1453
    %v1455 = vrot.slane %v1446, %v1454
    %v1458 = vmul.f32 %v1443, %v1451
    %v1459 = vmul.f32 %v1444, %v1455
    %v1460 = vadd.f32 %v1414, %v1458
    %v1461 = vadd.f32 %v1415, %v1459
    %v1462 = vstv %s150
    %v1463 = vmul.f32 %v1462, %v95
    %v1464 = vmul.f32 %v1462, %v96
    %v1465 = vmul.f32 %v1462, %v97
    %v1466 = vmul.f32 %v1462, %v98
    %v1467 = vstv %s199
    %v1468 = vmul.f32 %v1467, %v104
    %v1469 = vmul.f32 %v1467, %v110
    %v1470 = vmul.f32 %v1467, %v116
    %v1471 = vmul.f32 %v1467, %v122
    %v1472 = vadd.f32 %v1463, %v1468
    %v1473 = vadd.f32 %v1464, %v1469
    %v1474 = vadd.f32 %v1465, %v1470
    %v1475 = vadd.f32 %v1466, %v1471
    %v1480 = vsel %vm239, %v1474, %v1472
    %v1481 = vsel %vm239, %v1475, %v1473
    %1484 = vrot.lane.b32.xlu0 %v1480, 125
    %v1485 = vpop.permute.xlu0 %1484
    %1486 = vrot.lane.b32.xlu0 %v1481, 125
    %v1487 = vpop.permute.xlu0 %1486
    %vm1488 = vcmp.lt.s32.totalorder %v249, 125
    %v1489 = vsel %vm1488, %v1485, %v1487
    %v1490 = vsel %vm1488, %v1487, %v1485
    %s1491 = scalar_lea.vmem [#allocation4], 51
    %v1492 = vld [vmem:[%s1491] ss:$8 sm:$0x3]
    %v1494 = vlaneseq
    %v1495 = vshrl.u32 %v1494, 7
    %v1496 = vsub.s32 0, %v1495
    %v1497 = vrot.slane %v1492, %v1496
    %v1498 = vlaneseq
    %v1499 = vshrl.u32 %v1498, 7
    %v1500 = vsub.s32 1, %v1499
    %v1501 = vrot.slane %v1492, %v1500
    %v1504 = vmul.f32 %v1489, %v1497
    %v1505 = vmul.f32 %v1490, %v1501
    %v1506 = vadd.f32 %v1460, %v1504
    %v1507 = vadd.f32 %v1461, %v1505
    %v1508 = vstv %s151
    %v1509 = vmul.f32 %v1508, %v95
    %v1510 = vmul.f32 %v1508, %v96
    %v1511 = vmul.f32 %v1508, %v97
    %v1512 = vmul.f32 %v1508, %v98
    %v1513 = vstv %s200
    %v1514 = vmul.f32 %v1513, %v104
    %v1515 = vmul.f32 %v1513, %v110
    %v1516 = vmul.f32 %v1513, %v116
    %v1517 = vmul.f32 %v1513, %v122
    %v1518 = vadd.f32 %v1509, %v1514
    %v1519 = vadd.f32 %v1510, %v1515
    %v1520 = vadd.f32 %v1511, %v1516
    %v1521 = vadd.f32 %v1512, %v1517
    %v1526 = vsel %vm239, %v1520, %v1518
    %v1527 = vsel %vm239, %v1521, %v1519
    %1530 = vrot.lane.b32.xlu0 %v1526, 115
    %v1531 = vpop.permute.xlu0 %1530
    %1532 = vrot.lane.b32.xlu0 %v1527, 115
    %v1533 = vpop.permute.xlu0 %1532
    %vm1534 = vcmp.lt.s32.totalorder %v249, 115
    %v1535 = vsel %vm1534, %v1531, %v1533
    %v1536 = vsel %vm1534, %v1533, %v1531
    %s1537 = scalar_lea.vmem [#allocation4], 52
    %v1538 = vld [vmem:[%s1537] ss:$8 sm:$0x3]
    %v1540 = vlaneseq
    %v1541 = vshrl.u32 %v1540, 7
    %v1542 = vsub.s32 0, %v1541
    %v1543 = vrot.slane %v1538, %v1542
    %v1544 = vlaneseq
    %v1545 = vshrl.u32 %v1544, 7
    %v1546 = vsub.s32 1, %v1545
    %v1547 = vrot.slane %v1538, %v1546
    %v1550 = vmul.f32 %v1535, %v1543
    %v1551 = vmul.f32 %v1536, %v1547
    %v1552 = vadd.f32 %v1506, %v1550
    %v1553 = vadd.f32 %v1507, %v1551
    %v1554 = vstv %s152
    %v1555 = vmul.f32 %v1554, %v95
    %v1556 = vmul.f32 %v1554, %v96
    %v1557 = vmul.f32 %v1554, %v97
    %v1558 = vmul.f32 %v1554, %v98
    %v1559 = vstv %s201
    %v1560 = vmul.f32 %v1559, %v104
    %v1561 = vmul.f32 %v1559, %v110
    %v1562 = vmul.f32 %v1559, %v116
    %v1563 = vmul.f32 %v1559, %v122
    %v1564 = vadd.f32 %v1555, %v1560
    %v1565 = vadd.f32 %v1556, %v1561
    %v1566 = vadd.f32 %v1557, %v1562
    %v1567 = vadd.f32 %v1558, %v1563
    %v1572 = vsel %vm239, %v1566, %v1564
    %v1573 = vsel %vm239, %v1567, %v1565
    %1576 = vrot.lane.b32.xlu0 %v1572, 114
    %v1577 = vpop.permute.xlu0 %1576
    %1578 = vrot.lane.b32.xlu0 %v1573, 114
    %v1579 = vpop.permute.xlu0 %1578
    %vm1580 = vcmp.lt.s32.totalorder %v249, 114
    %v1581 = vsel %vm1580, %v1577, %v1579
    %v1582 = vsel %vm1580, %v1579, %v1577
    %s1583 = scalar_lea.vmem [#allocation4], 53
    %v1584 = vld [vmem:[%s1583] ss:$8 sm:$0x3]
    %v1586 = vlaneseq
    %v1587 = vshrl.u32 %v1586, 7
    %v1588 = vsub.s32 0, %v1587
    %v1589 = vrot.slane %v1584, %v1588
    %v1590 = vlaneseq
    %v1591 = vshrl.u32 %v1590, 7
    %v1592 = vsub.s32 1, %v1591
    %v1593 = vrot.slane %v1584, %v1592
    %v1596 = vmul.f32 %v1581, %v1589
    %v1597 = vmul.f32 %v1582, %v1593
    %v1598 = vadd.f32 %v1552, %v1596
    %v1599 = vadd.f32 %v1553, %v1597
    %v1600 = vstv %s153
    %v1601 = vmul.f32 %v1600, %v95
    %v1602 = vmul.f32 %v1600, %v96
    %v1603 = vmul.f32 %v1600, %v97
    %v1604 = vmul.f32 %v1600, %v98
    %v1605 = vstv %s202
    %v1606 = vmul.f32 %v1605, %v104
    %v1607 = vmul.f32 %v1605, %v110
    %v1608 = vmul.f32 %v1605, %v116
    %v1609 = vmul.f32 %v1605, %v122
    %v1610 = vadd.f32 %v1601, %v1606
    %v1611 = vadd.f32 %v1602, %v1607
    %v1612 = vadd.f32 %v1603, %v1608
    %v1613 = vadd.f32 %v1604, %v1609
    %v1618 = vsel %vm239, %v1612, %v1610
    %v1619 = vsel %vm239, %v1613, %v1611
    %1622 = vrot.lane.b32.xlu0 %v1618, 113
    %v1623 = vpop.permute.xlu0 %1622
    %1624 = vrot.lane.b32.xlu0 %v1619, 113
    %v1625 = vpop.permute.xlu0 %1624
    %vm1626 = vcmp.lt.s32.totalorder %v249, 113
    %v1627 = vsel %vm1626, %v1623, %v1625
    %v1628 = vsel %vm1626, %v1625, %v1623
    %s1629 = scalar_lea.vmem [#allocation4], 54
    %v1630 = vld [vmem:[%s1629] ss:$8 sm:$0x3]
    %v1632 = vlaneseq
    %v1633 = vshrl.u32 %v1632, 7
    %v1634 = vsub.s32 0, %v1633
    %v1635 = vrot.slane %v1630, %v1634
    %v1636 = vlaneseq
    %v1637 = vshrl.u32 %v1636, 7
    %v1638 = vsub.s32 1, %v1637
    %v1639 = vrot.slane %v1630, %v1638
    %v1642 = vmul.f32 %v1627, %v1635
    %v1643 = vmul.f32 %v1628, %v1639
    %v1644 = vadd.f32 %v1598, %v1642
    %v1645 = vadd.f32 %v1599, %v1643
    %v1646 = vstv %s154
    %v1647 = vmul.f32 %v1646, %v95
    %v1648 = vmul.f32 %v1646, %v96
    %v1649 = vmul.f32 %v1646, %v97
    %v1650 = vmul.f32 %v1646, %v98
    %v1651 = vstv %s203
    %v1652 = vmul.f32 %v1651, %v104
    %v1653 = vmul.f32 %v1651, %v110
    %v1654 = vmul.f32 %v1651, %v116
    %v1655 = vmul.f32 %v1651, %v122
    %v1656 = vadd.f32 %v1647, %v1652
    %v1657 = vadd.f32 %v1648, %v1653
    %v1658 = vadd.f32 %v1649, %v1654
    %v1659 = vadd.f32 %v1650, %v1655
    %v1664 = vsel %vm239, %v1658, %v1656
    %v1665 = vsel %vm239, %v1659, %v1657
    %1668 = vrot.lane.b32.xlu0 %v1664, 112
    %v1669 = vpop.permute.xlu0 %1668
    %1670 = vrot.lane.b32.xlu0 %v1665, 112
    %v1671 = vpop.permute.xlu0 %1670
    %vm1672 = vcmp.lt.s32.totalorder %v249, 112
    %v1673 = vsel %vm1672, %v1669, %v1671
    %v1674 = vsel %vm1672, %v1671, %v1669
    %s1675 = scalar_lea.vmem [#allocation4], 55
    %v1676 = vld [vmem:[%s1675] ss:$8 sm:$0x3]
    %v1678 = vlaneseq
    %v1679 = vshrl.u32 %v1678, 7
    %v1680 = vsub.s32 0, %v1679
    %v1681 = vrot.slane %v1676, %v1680
    %v1682 = vlaneseq
    %v1683 = vshrl.u32 %v1682, 7
    %v1684 = vsub.s32 1, %v1683
    %v1685 = vrot.slane %v1676, %v1684
    %v1688 = vmul.f32 %v1673, %v1681
    %v1689 = vmul.f32 %v1674, %v1685
    %v1690 = vadd.f32 %v1644, %v1688
    %v1691 = vadd.f32 %v1645, %v1689
    %v1692 = vstv %s155
    %v1693 = vmul.f32 %v1692, %v95
    %v1694 = vmul.f32 %v1692, %v96
    %v1695 = vmul.f32 %v1692, %v97
    %v1696 = vmul.f32 %v1692, %v98
    %v1697 = vstv %s204
    %v1698 = vmul.f32 %v1697, %v104
    %v1699 = vmul.f32 %v1697, %v110
    %v1700 = vmul.f32 %v1697, %v116
    %v1701 = vmul.f32 %v1697, %v122
    %v1702 = vadd.f32 %v1693, %v1698
    %v1703 = vadd.f32 %v1694, %v1699
    %v1704 = vadd.f32 %v1695, %v1700
    %v1705 = vadd.f32 %v1696, %v1701
    %v1710 = vsel %vm239, %v1704, %v1702
    %v1711 = vsel %vm239, %v1705, %v1703
    %1714 = vrot.lane.b32.xlu0 %v1710, 111
    %v1715 = vpop.permute.xlu0 %1714
    %1716 = vrot.lane.b32.xlu0 %v1711, 111
    %v1717 = vpop.permute.xlu0 %1716
    %vm1718 = vcmp.lt.s32.totalorder %v249, 111
    %v1719 = vsel %vm1718, %v1715, %v1717
    %v1720 = vsel %vm1718, %v1717, %v1715
    %s1721 = scalar_lea.vmem [#allocation4], 64
    %v1722 = vld [vmem:[%s1721] ss:$8 sm:$0x3]
    %v1724 = vlaneseq
    %v1725 = vshrl.u32 %v1724, 7
    %v1726 = vsub.s32 0, %v1725
    %v1727 = vrot.slane %v1722, %v1726
    %v1728 = vlaneseq
    %v1729 = vshrl.u32 %v1728, 7
    %v1730 = vsub.s32 1, %v1729
    %v1731 = vrot.slane %v1722, %v1730
    %v1734 = vmul.f32 %v1719, %v1727
    %v1735 = vmul.f32 %v1720, %v1731
    %v1736 = vadd.f32 %v1690, %v1734
    %v1737 = vadd.f32 %v1691, %v1735
    %v1738 = vstv %s156
    %v1739 = vmul.f32 %v1738, %v95
    %v1740 = vmul.f32 %v1738, %v96
    %v1741 = vmul.f32 %v1738, %v97
    %v1742 = vmul.f32 %v1738, %v98
    %v1743 = vstv %s205
    %v1744 = vmul.f32 %v1743, %v104
    %v1745 = vmul.f32 %v1743, %v110
    %v1746 = vmul.f32 %v1743, %v116
    %v1747 = vmul.f32 %v1743, %v122
    %v1748 = vadd.f32 %v1739, %v1744
    %v1749 = vadd.f32 %v1740, %v1745
    %v1750 = vadd.f32 %v1741, %v1746
    %v1751 = vadd.f32 %v1742, %v1747
    %v1756 = vsel %vm239, %v1750, %v1748
    %v1757 = vsel %vm239, %v1751, %v1749
    %1760 = vrot.lane.b32.xlu0 %v1756, 110
    %v1761 = vpop.permute.xlu0 %1760
    %1762 = vrot.lane.b32.xlu0 %v1757, 110
    %v1763 = vpop.permute.xlu0 %1762
    %vm1764 = vcmp.lt.s32.totalorder %v249, 110
    %v1765 = vsel %vm1764, %v1761, %v1763
    %v1766 = vsel %vm1764, %v1763, %v1761
    %s1767 = scalar_lea.vmem [#allocation4], 65
    %v1768 = vld [vmem:[%s1767] ss:$8 sm:$0x3]
    %v1770 = vlaneseq
    %v1771 = vshrl.u32 %v1770, 7
    %v1772 = vsub.s32 0, %v1771
    %v1773 = vrot.slane %v1768, %v1772
    %v1774 = vlaneseq
    %v1775 = vshrl.u32 %v1774, 7
    %v1776 = vsub.s32 1, %v1775
    %v1777 = vrot.slane %v1768, %v1776
    %v1780 = vmul.f32 %v1765, %v1773
    %v1781 = vmul.f32 %v1766, %v1777
    %v1782 = vadd.f32 %v1736, %v1780
    %v1783 = vadd.f32 %v1737, %v1781
    %v1784 = vstv %s157
    %v1785 = vmul.f32 %v1784, %v95
    %v1786 = vmul.f32 %v1784, %v96
    %v1787 = vmul.f32 %v1784, %v97
    %v1788 = vmul.f32 %v1784, %v98
    %v1789 = vstv %s206
    %v1790 = vmul.f32 %v1789, %v104
    %v1791 = vmul.f32 %v1789, %v110
    %v1792 = vmul.f32 %v1789, %v116
    %v1793 = vmul.f32 %v1789, %v122
    %v1794 = vadd.f32 %v1785, %v1790
    %v1795 = vadd.f32 %v1786, %v1791
    %v1796 = vadd.f32 %v1787, %v1792
    %v1797 = vadd.f32 %v1788, %v1793
    %v1802 = vsel %vm239, %v1796, %v1794
    %v1803 = vsel %vm239, %v1797, %v1795
    %1806 = vrot.lane.b32.xlu0 %v1802, 109
    %v1807 = vpop.permute.xlu0 %1806
    %1808 = vrot.lane.b32.xlu0 %v1803, 109
    %v1809 = vpop.permute.xlu0 %1808
    %vm1810 = vcmp.lt.s32.totalorder %v249, 109
    %v1811 = vsel %vm1810, %v1807, %v1809
    %v1812 = vsel %vm1810, %v1809, %v1807
    %s1813 = scalar_lea.vmem [#allocation4], 66
    %v1814 = vld [vmem:[%s1813] ss:$8 sm:$0x3]
    %v1816 = vlaneseq
    %v1817 = vshrl.u32 %v1816, 7
    %v1818 = vsub.s32 0, %v1817
    %v1819 = vrot.slane %v1814, %v1818
    %v1820 = vlaneseq
    %v1821 = vshrl.u32 %v1820, 7
    %v1822 = vsub.s32 1, %v1821
    %v1823 = vrot.slane %v1814, %v1822
    %v1826 = vmul.f32 %v1811, %v1819
    %v1827 = vmul.f32 %v1812, %v1823
    %v1828 = vadd.f32 %v1782, %v1826
    %v1829 = vadd.f32 %v1783, %v1827
    %v1830 = vstv %s158
    %v1831 = vmul.f32 %v1830, %v95
    %v1832 = vmul.f32 %v1830, %v96
    %v1833 = vmul.f32 %v1830, %v97
    %v1834 = vmul.f32 %v1830, %v98
    %v1835 = vstv %s207
    %v1836 = vmul.f32 %v1835, %v104
    %v1837 = vmul.f32 %v1835, %v110
    %v1838 = vmul.f32 %v1835, %v116
    %v1839 = vmul.f32 %v1835, %v122
    %v1840 = vadd.f32 %v1831, %v1836
    %v1841 = vadd.f32 %v1832, %v1837
    %v1842 = vadd.f32 %v1833, %v1838
    %v1843 = vadd.f32 %v1834, %v1839
    %v1848 = vsel %vm239, %v1842, %v1840
    %v1849 = vsel %vm239, %v1843, %v1841
    %1852 = vrot.lane.b32.xlu0 %v1848, 99
    %v1853 = vpop.permute.xlu0 %1852
    %1854 = vrot.lane.b32.xlu0 %v1849, 99
    %v1855 = vpop.permute.xlu0 %1854
    %vm1856 = vcmp.lt.s32.totalorder %v249, 99
    %v1857 = vsel %vm1856, %v1853, %v1855
    %v1858 = vsel %vm1856, %v1855, %v1853
    %s1859 = scalar_lea.vmem [#allocation4], 67
    %v1860 = vld [vmem:[%s1859] ss:$8 sm:$0x3]
    %v1862 = vlaneseq
    %v1863 = vshrl.u32 %v1862, 7
    %v1864 = vsub.s32 0, %v1863
    %v1865 = vrot.slane %v1860, %v1864
    %v1866 = vlaneseq
    %v1867 = vshrl.u32 %v1866, 7
    %v1868 = vsub.s32 1, %v1867
    %v1869 = vrot.slane %v1860, %v1868
    %v1872 = vmul.f32 %v1857, %v1865
    %v1873 = vmul.f32 %v1858, %v1869
    %v1874 = vadd.f32 %v1828, %v1872
    %v1875 = vadd.f32 %v1829, %v1873
    %v1876 = vstv %s159
    %v1877 = vmul.f32 %v1876, %v95
    %v1878 = vmul.f32 %v1876, %v96
    %v1879 = vmul.f32 %v1876, %v97
    %v1880 = vmul.f32 %v1876, %v98
    %v1881 = vstv %s208
    %v1882 = vmul.f32 %v1881, %v104
    %v1883 = vmul.f32 %v1881, %v110
    %v1884 = vmul.f32 %v1881, %v116
    %v1885 = vmul.f32 %v1881, %v122
    %v1886 = vadd.f32 %v1877, %v1882
    %v1887 = vadd.f32 %v1878, %v1883
    %v1888 = vadd.f32 %v1879, %v1884
    %v1889 = vadd.f32 %v1880, %v1885
    %v1894 = vsel %vm239, %v1888, %v1886
    %v1895 = vsel %vm239, %v1889, %v1887
    %1898 = vrot.lane.b32.xlu0 %v1894, 98
    %v1899 = vpop.permute.xlu0 %1898
    %1900 = vrot.lane.b32.xlu0 %v1895, 98
    %v1901 = vpop.permute.xlu0 %1900
    %vm1902 = vcmp.lt.s32.totalorder %v249, 98
    %v1903 = vsel %vm1902, %v1899, %v1901
    %v1904 = vsel %vm1902, %v1901, %v1899
    %s1905 = scalar_lea.vmem [#allocation4], 68
    %v1906 = vld [vmem:[%s1905] ss:$8 sm:$0x3]
    %v1908 = vlaneseq
    %v1909 = vshrl.u32 %v1908, 7
    %v1910 = vsub.s32 0, %v1909
    %v1911 = vrot.slane %v1906, %v1910
    %v1912 = vlaneseq
    %v1913 = vshrl.u32 %v1912, 7
    %v1914 = vsub.s32 1, %v1913
    %v1915 = vrot.slane %v1906, %v1914
    %v1918 = vmul.f32 %v1903, %v1911
    %v1919 = vmul.f32 %v1904, %v1915
    %v1920 = vadd.f32 %v1874, %v1918
    %v1921 = vadd.f32 %v1875, %v1919
    %v1922 = vstv %s160
    %v1923 = vmul.f32 %v1922, %v95
    %v1924 = vmul.f32 %v1922, %v96
    %v1925 = vmul.f32 %v1922, %v97
    %v1926 = vmul.f32 %v1922, %v98
    %v1927 = vstv %s209
    %v1928 = vmul.f32 %v1927, %v104
    %v1929 = vmul.f32 %v1927, %v110
    %v1930 = vmul.f32 %v1927, %v116
    %v1931 = vmul.f32 %v1927, %v122
    %v1932 = vadd.f32 %v1923, %v1928
    %v1933 = vadd.f32 %v1924, %v1929
    %v1934 = vadd.f32 %v1925, %v1930
    %v1935 = vadd.f32 %v1926, %v1931
    %v1940 = vsel %vm239, %v1934, %v1932
    %v1941 = vsel %vm239, %v1935, %v1933
    %1944 = vrot.lane.b32.xlu0 %v1940, 97
    %v1945 = vpop.permute.xlu0 %1944
    %1946 = vrot.lane.b32.xlu0 %v1941, 97
    %v1947 = vpop.permute.xlu0 %1946
    %vm1948 = vcmp.lt.s32.totalorder %v249, 97
    %v1949 = vsel %vm1948, %v1945, %v1947
    %v1950 = vsel %vm1948, %v1947, %v1945
    %s1951 = scalar_lea.vmem [#allocation4], 69
    %v1952 = vld [vmem:[%s1951] ss:$8 sm:$0x3]
    %v1954 = vlaneseq
    %v1955 = vshrl.u32 %v1954, 7
    %v1956 = vsub.s32 0, %v1955
    %v1957 = vrot.slane %v1952, %v1956
    %v1958 = vlaneseq
    %v1959 = vshrl.u32 %v1958, 7
    %v1960 = vsub.s32 1, %v1959
    %v1961 = vrot.slane %v1952, %v1960
    %v1964 = vmul.f32 %v1949, %v1957
    %v1965 = vmul.f32 %v1950, %v1961
    %v1966 = vadd.f32 %v1920, %v1964
    %v1967 = vadd.f32 %v1921, %v1965
    %v1968 = vstv %s161
    %v1969 = vmul.f32 %v1968, %v95
    %v1970 = vmul.f32 %v1968, %v96
    %v1971 = vmul.f32 %v1968, %v97
    %v1972 = vmul.f32 %v1968, %v98
    %v1973 = vstv %s210
    %v1974 = vmul.f32 %v1973, %v104
    %v1975 = vmul.f32 %v1973, %v110
    %v1976 = vmul.f32 %v1973, %v116
    %v1977 = vmul.f32 %v1973, %v122
    %v1978 = vadd.f32 %v1969, %v1974
    %v1979 = vadd.f32 %v1970, %v1975
    %v1980 = vadd.f32 %v1971, %v1976
    %v1981 = vadd.f32 %v1972, %v1977
    %v1986 = vsel %vm239, %v1980, %v1978
    %v1987 = vsel %vm239, %v1981, %v1979
    %1990 = vrot.lane.b32.xlu0 %v1986, 96
    %v1991 = vpop.permute.xlu0 %1990
    %1992 = vrot.lane.b32.xlu0 %v1987, 96
    %v1993 = vpop.permute.xlu0 %1992
    %vm1994 = vcmp.lt.s32.totalorder %v249, 96
    %v1995 = vsel %vm1994, %v1991, %v1993
    %v1996 = vsel %vm1994, %v1993, %v1991
    %s1997 = scalar_lea.vmem [#allocation4], 70
    %v1998 = vld [vmem:[%s1997] ss:$8 sm:$0x3]
    %v2000 = vlaneseq
    %v2001 = vshrl.u32 %v2000, 7
    %v2002 = vsub.s32 0, %v2001
    %v2003 = vrot.slane %v1998, %v2002
    %v2004 = vlaneseq
    %v2005 = vshrl.u32 %v2004, 7
    %v2006 = vsub.s32 1, %v2005
    %v2007 = vrot.slane %v1998, %v2006
    %v2010 = vmul.f32 %v1995, %v2003
    %v2011 = vmul.f32 %v1996, %v2007
    %v2012 = vadd.f32 %v1966, %v2010
    %v2013 = vadd.f32 %v1967, %v2011
    %v2014 = vstv %s162
    %v2015 = vmul.f32 %v2014, %v95
    %v2016 = vmul.f32 %v2014, %v96
    %v2017 = vmul.f32 %v2014, %v97
    %v2018 = vmul.f32 %v2014, %v98
    %v2019 = vstv %s211
    %v2020 = vmul.f32 %v2019, %v104
    %v2021 = vmul.f32 %v2019, %v110
    %v2022 = vmul.f32 %v2019, %v116
    %v2023 = vmul.f32 %v2019, %v122
    %v2024 = vadd.f32 %v2015, %v2020
    %v2025 = vadd.f32 %v2016, %v2021
    %v2026 = vadd.f32 %v2017, %v2022
    %v2027 = vadd.f32 %v2018, %v2023
    %v2032 = vsel %vm239, %v2026, %v2024
    %v2033 = vsel %vm239, %v2027, %v2025
    %2036 = vrot.lane.b32.xlu0 %v2032, 95
    %v2037 = vpop.permute.xlu0 %2036
    %2038 = vrot.lane.b32.xlu0 %v2033, 95
    %v2039 = vpop.permute.xlu0 %2038
    %vm2040 = vcmp.lt.s32.totalorder %v249, 95
    %v2041 = vsel %vm2040, %v2037, %v2039
    %v2042 = vsel %vm2040, %v2039, %v2037
    %s2043 = scalar_lea.vmem [#allocation4], 71
    %v2044 = vld [vmem:[%s2043] ss:$8 sm:$0x3]
    %v2046 = vlaneseq
    %v2047 = vshrl.u32 %v2046, 7
    %v2048 = vsub.s32 0, %v2047
    %v2049 = vrot.slane %v2044, %v2048
    %v2050 = vlaneseq
    %v2051 = vshrl.u32 %v2050, 7
    %v2052 = vsub.s32 1, %v2051
    %v2053 = vrot.slane %v2044, %v2052
    %v2056 = vmul.f32 %v2041, %v2049
    %v2057 = vmul.f32 %v2042, %v2053
    %v2058 = vadd.f32 %v2012, %v2056
    %v2059 = vadd.f32 %v2013, %v2057
    %v2060 = vstv %s163
    %v2061 = vmul.f32 %v2060, %v95
    %v2062 = vmul.f32 %v2060, %v96
    %v2063 = vmul.f32 %v2060, %v97
    %v2064 = vmul.f32 %v2060, %v98
    %v2065 = vstv %s212
    %v2066 = vmul.f32 %v2065, %v104
    %v2067 = vmul.f32 %v2065, %v110
    %v2068 = vmul.f32 %v2065, %v116
    %v2069 = vmul.f32 %v2065, %v122
    %v2070 = vadd.f32 %v2061, %v2066
    %v2071 = vadd.f32 %v2062, %v2067
    %v2072 = vadd.f32 %v2063, %v2068
    %v2073 = vadd.f32 %v2064, %v2069
    %v2078 = vsel %vm239, %v2072, %v2070
    %v2079 = vsel %vm239, %v2073, %v2071
    %2082 = vrot.lane.b32.xlu0 %v2078, 94
    %v2083 = vpop.permute.xlu0 %2082
    %2084 = vrot.lane.b32.xlu0 %v2079, 94
    %v2085 = vpop.permute.xlu0 %2084
    %vm2086 = vcmp.lt.s32.totalorder %v249, 94
    %v2087 = vsel %vm2086, %v2083, %v2085
    %v2088 = vsel %vm2086, %v2085, %v2083
    %s2089 = scalar_lea.vmem [#allocation4], 80
    %v2090 = vld [vmem:[%s2089] ss:$8 sm:$0x3]
    %v2092 = vlaneseq
    %v2093 = vshrl.u32 %v2092, 7
    %v2094 = vsub.s32 0, %v2093
    %v2095 = vrot.slane %v2090, %v2094
    %v2096 = vlaneseq
    %v2097 = vshrl.u32 %v2096, 7
    %v2098 = vsub.s32 1, %v2097
    %v2099 = vrot.slane %v2090, %v2098
    %v2102 = vmul.f32 %v2087, %v2095
    %v2103 = vmul.f32 %v2088, %v2099
    %v2104 = vadd.f32 %v2058, %v2102
    %v2105 = vadd.f32 %v2059, %v2103
    %v2106 = vstv %s164
    %v2107 = vmul.f32 %v2106, %v95
    %v2108 = vmul.f32 %v2106, %v96
    %v2109 = vmul.f32 %v2106, %v97
    %v2110 = vmul.f32 %v2106, %v98
    %v2111 = vstv %s213
    %v2112 = vmul.f32 %v2111, %v104
    %v2113 = vmul.f32 %v2111, %v110
    %v2114 = vmul.f32 %v2111, %v116
    %v2115 = vmul.f32 %v2111, %v122
    %v2116 = vadd.f32 %v2107, %v2112
    %v2117 = vadd.f32 %v2108, %v2113
    %v2118 = vadd.f32 %v2109, %v2114
    %v2119 = vadd.f32 %v2110, %v2115
    %v2124 = vsel %vm239, %v2118, %v2116
    %v2125 = vsel %vm239, %v2119, %v2117
    %2128 = vrot.lane.b32.xlu0 %v2124, 93
    %v2129 = vpop.permute.xlu0 %2128
    %2130 = vrot.lane.b32.xlu0 %v2125, 93
    %v2131 = vpop.permute.xlu0 %2130
    %vm2132 = vcmp.lt.s32.totalorder %v249, 93
    %v2133 = vsel %vm2132, %v2129, %v2131
    %v2134 = vsel %vm2132, %v2131, %v2129
    %s2135 = scalar_lea.vmem [#allocation4], 81
    %v2136 = vld [vmem:[%s2135] ss:$8 sm:$0x3]
    %v2138 = vlaneseq
    %v2139 = vshrl.u32 %v2138, 7
    %v2140 = vsub.s32 0, %v2139
    %v2141 = vrot.slane %v2136, %v2140
    %v2142 = vlaneseq
    %v2143 = vshrl.u32 %v2142, 7
    %v2144 = vsub.s32 1, %v2143
    %v2145 = vrot.slane %v2136, %v2144
    %v2148 = vmul.f32 %v2133, %v2141
    %v2149 = vmul.f32 %v2134, %v2145
    %v2150 = vadd.f32 %v2104, %v2148
    %v2151 = vadd.f32 %v2105, %v2149
    %v2152 = vstv %s165
    %v2153 = vmul.f32 %v2152, %v95
    %v2154 = vmul.f32 %v2152, %v96
    %v2155 = vmul.f32 %v2152, %v97
    %v2156 = vmul.f32 %v2152, %v98
    %v2157 = vstv %s214
    %v2158 = vmul.f32 %v2157, %v104
    %v2159 = vmul.f32 %v2157, %v110
    %v2160 = vmul.f32 %v2157, %v116
    %v2161 = vmul.f32 %v2157, %v122
    %v2162 = vadd.f32 %v2153, %v2158
    %v2163 = vadd.f32 %v2154, %v2159
    %v2164 = vadd.f32 %v2155, %v2160
    %v2165 = vadd.f32 %v2156, %v2161
    %v2170 = vsel %vm239, %v2164, %v2162
    %v2171 = vsel %vm239, %v2165, %v2163
    %2174 = vrot.lane.b32.xlu0 %v2170, 83
    %v2175 = vpop.permute.xlu0 %2174
    %2176 = vrot.lane.b32.xlu0 %v2171, 83
    %v2177 = vpop.permute.xlu0 %2176
    %vm2178 = vcmp.lt.s32.totalorder %v249, 83
    %v2179 = vsel %vm2178, %v2175, %v2177
    %v2180 = vsel %vm2178, %v2177, %v2175
    %s2181 = scalar_lea.vmem [#allocation4], 82
    %v2182 = vld [vmem:[%s2181] ss:$8 sm:$0x3]
    %v2184 = vlaneseq
    %v2185 = vshrl.u32 %v2184, 7
    %v2186 = vsub.s32 0, %v2185
    %v2187 = vrot.slane %v2182, %v2186
    %v2188 = vlaneseq
    %v2189 = vshrl.u32 %v2188, 7
    %v2190 = vsub.s32 1, %v2189
    %v2191 = vrot.slane %v2182, %v2190
    %v2194 = vmul.f32 %v2179, %v2187
    %v2195 = vmul.f32 %v2180, %v2191
    %v2196 = vadd.f32 %v2150, %v2194
    %v2197 = vadd.f32 %v2151, %v2195
    %v2198 = vstv %s166
    %v2199 = vmul.f32 %v2198, %v95
    %v2200 = vmul.f32 %v2198, %v96
    %v2201 = vmul.f32 %v2198, %v97
    %v2202 = vmul.f32 %v2198, %v98
    %v2203 = vstv %s215
    %v2204 = vmul.f32 %v2203, %v104
    %v2205 = vmul.f32 %v2203, %v110
    %v2206 = vmul.f32 %v2203, %v116
    %v2207 = vmul.f32 %v2203, %v122
    %v2208 = vadd.f32 %v2199, %v2204
    %v2209 = vadd.f32 %v2200, %v2205
    %v2210 = vadd.f32 %v2201, %v2206
    %v2211 = vadd.f32 %v2202, %v2207
    %v2216 = vsel %vm239, %v2210, %v2208
    %v2217 = vsel %vm239, %v2211, %v2209
    %2220 = vrot.lane.b32.xlu0 %v2216, 82
    %v2221 = vpop.permute.xlu0 %2220
    %2222 = vrot.lane.b32.xlu0 %v2217, 82
    %v2223 = vpop.permute.xlu0 %2222
    %vm2224 = vcmp.lt.s32.totalorder %v249, 82
    %v2225 = vsel %vm2224, %v2221, %v2223
    %v2226 = vsel %vm2224, %v2223, %v2221
    %s2227 = scalar_lea.vmem [#allocation4], 83
    %v2228 = vld [vmem:[%s2227] ss:$8 sm:$0x3]
    %v2230 = vlaneseq
    %v2231 = vshrl.u32 %v2230, 7
    %v2232 = vsub.s32 0, %v2231
    %v2233 = vrot.slane %v2228, %v2232
    %v2234 = vlaneseq
    %v2235 = vshrl.u32 %v2234, 7
    %v2236 = vsub.s32 1, %v2235
    %v2237 = vrot.slane %v2228, %v2236
    %v2240 = vmul.f32 %v2225, %v2233
    %v2241 = vmul.f32 %v2226, %v2237
    %v2242 = vadd.f32 %v2196, %v2240
    %v2243 = vadd.f32 %v2197, %v2241
    %v2244 = vstv %s167
    %v2245 = vmul.f32 %v2244, %v95
    %v2246 = vmul.f32 %v2244, %v96
    %v2247 = vmul.f32 %v2244, %v97
    %v2248 = vmul.f32 %v2244, %v98
    %v2249 = vstv %s216
    %v2250 = vmul.f32 %v2249, %v104
    %v2251 = vmul.f32 %v2249, %v110
    %v2252 = vmul.f32 %v2249, %v116
    %v2253 = vmul.f32 %v2249, %v122
    %v2254 = vadd.f32 %v2245, %v2250
    %v2255 = vadd.f32 %v2246, %v2251
    %v2256 = vadd.f32 %v2247, %v2252
    %v2257 = vadd.f32 %v2248, %v2253
    %v2262 = vsel %vm239, %v2256, %v2254
    %v2263 = vsel %vm239, %v2257, %v2255
    %2266 = vrot.lane.b32.xlu0 %v2262, 81
    %v2267 = vpop.permute.xlu0 %2266
    %2268 = vrot.lane.b32.xlu0 %v2263, 81
    %v2269 = vpop.permute.xlu0 %2268
    %vm2270 = vcmp.lt.s32.totalorder %v249, 81
    %v2271 = vsel %vm2270, %v2267, %v2269
    %v2272 = vsel %vm2270, %v2269, %v2267
    %s2273 = scalar_lea.vmem [#allocation4], 84
    %v2274 = vld [vmem:[%s2273] ss:$8 sm:$0x3]
    %v2276 = vlaneseq
    %v2277 = vshrl.u32 %v2276, 7
    %v2278 = vsub.s32 0, %v2277
    %v2279 = vrot.slane %v2274, %v2278
    %v2280 = vlaneseq
    %v2281 = vshrl.u32 %v2280, 7
    %v2282 = vsub.s32 1, %v2281
    %v2283 = vrot.slane %v2274, %v2282
    %v2286 = vmul.f32 %v2271, %v2279
    %v2287 = vmul.f32 %v2272, %v2283
    %v2288 = vadd.f32 %v2242, %v2286
    %v2289 = vadd.f32 %v2243, %v2287
    %v2290 = vstv %s168
    %v2291 = vmul.f32 %v2290, %v95
    %v2292 = vmul.f32 %v2290, %v96
    %v2293 = vmul.f32 %v2290, %v97
    %v2294 = vmul.f32 %v2290, %v98
    %v2295 = vstv %s217
    %v2296 = vmul.f32 %v2295, %v104
    %v2297 = vmul.f32 %v2295, %v110
    %v2298 = vmul.f32 %v2295, %v116
    %v2299 = vmul.f32 %v2295, %v122
    %v2300 = vadd.f32 %v2291, %v2296
    %v2301 = vadd.f32 %v2292, %v2297
    %v2302 = vadd.f32 %v2293, %v2298
    %v2303 = vadd.f32 %v2294, %v2299
    %v2308 = vsel %vm239, %v2302, %v2300
    %v2309 = vsel %vm239, %v2303, %v2301
    %2312 = vrot.lane.b32.xlu0 %v2308, 80
    %v2313 = vpop.permute.xlu0 %2312
    %2314 = vrot.lane.b32.xlu0 %v2309, 80
    %v2315 = vpop.permute.xlu0 %2314
    %vm2316 = vcmp.lt.s32.totalorder %v249, 80
    %v2317 = vsel %vm2316, %v2313, %v2315
    %v2318 = vsel %vm2316, %v2315, %v2313
    %s2319 = scalar_lea.vmem [#allocation4], 85
    %v2320 = vld [vmem:[%s2319] ss:$8 sm:$0x3]
    %v2322 = vlaneseq
    %v2323 = vshrl.u32 %v2322, 7
    %v2324 = vsub.s32 0, %v2323
    %v2325 = vrot.slane %v2320, %v2324
    %v2326 = vlaneseq
    %v2327 = vshrl.u32 %v2326, 7
    %v2328 = vsub.s32 1, %v2327
    %v2329 = vrot.slane %v2320, %v2328
    %v2332 = vmul.f32 %v2317, %v2325
    %v2333 = vmul.f32 %v2318, %v2329
    %v2334 = vadd.f32 %v2288, %v2332
    %v2335 = vadd.f32 %v2289, %v2333
    %v2336 = vstv %s169
    %v2337 = vmul.f32 %v2336, %v95
    %v2338 = vmul.f32 %v2336, %v96
    %v2339 = vmul.f32 %v2336, %v97
    %v2340 = vmul.f32 %v2336, %v98
    %v2341 = vstv %s218
    %v2342 = vmul.f32 %v2341, %v104
    %v2343 = vmul.f32 %v2341, %v110
    %v2344 = vmul.f32 %v2341, %v116
    %v2345 = vmul.f32 %v2341, %v122
    %v2346 = vadd.f32 %v2337, %v2342
    %v2347 = vadd.f32 %v2338, %v2343
    %v2348 = vadd.f32 %v2339, %v2344
    %v2349 = vadd.f32 %v2340, %v2345
    %v2354 = vsel %vm239, %v2348, %v2346
    %v2355 = vsel %vm239, %v2349, %v2347
    %2358 = vrot.lane.b32.xlu0 %v2354, 79
    %v2359 = vpop.permute.xlu0 %2358
    %2360 = vrot.lane.b32.xlu0 %v2355, 79
    %v2361 = vpop.permute.xlu0 %2360
    %vm2362 = vcmp.lt.s32.totalorder %v249, 79
    %v2363 = vsel %vm2362, %v2359, %v2361
    %v2364 = vsel %vm2362, %v2361, %v2359
    %s2365 = scalar_lea.vmem [#allocation4], 86
    %v2366 = vld [vmem:[%s2365] ss:$8 sm:$0x3]
    %v2368 = vlaneseq
    %v2369 = vshrl.u32 %v2368, 7
    %v2370 = vsub.s32 0, %v2369
    %v2371 = vrot.slane %v2366, %v2370
    %v2372 = vlaneseq
    %v2373 = vshrl.u32 %v2372, 7
    %v2374 = vsub.s32 1, %v2373
    %v2375 = vrot.slane %v2366, %v2374
    %v2378 = vmul.f32 %v2363, %v2371
    %v2379 = vmul.f32 %v2364, %v2375
    %v2380 = vadd.f32 %v2334, %v2378
    %v2381 = vadd.f32 %v2335, %v2379
    %v2382 = vstv %s170
    %v2383 = vmul.f32 %v2382, %v95
    %v2384 = vmul.f32 %v2382, %v96
    %v2385 = vmul.f32 %v2382, %v97
    %v2386 = vmul.f32 %v2382, %v98
    %v2387 = vstv %s219
    %v2388 = vmul.f32 %v2387, %v104
    %v2389 = vmul.f32 %v2387, %v110
    %v2390 = vmul.f32 %v2387, %v116
    %v2391 = vmul.f32 %v2387, %v122
    %v2392 = vadd.f32 %v2383, %v2388
    %v2393 = vadd.f32 %v2384, %v2389
    %v2394 = vadd.f32 %v2385, %v2390
    %v2395 = vadd.f32 %v2386, %v2391
    %v2400 = vsel %vm239, %v2394, %v2392
    %v2401 = vsel %vm239, %v2395, %v2393
    %2404 = vrot.lane.b32.xlu0 %v2400, 78
    %v2405 = vpop.permute.xlu0 %2404
    %2406 = vrot.lane.b32.xlu0 %v2401, 78
    %v2407 = vpop.permute.xlu0 %2406
    %vm2408 = vcmp.lt.s32.totalorder %v249, 78
    %v2409 = vsel %vm2408, %v2405, %v2407
    %v2410 = vsel %vm2408, %v2407, %v2405
    %s2411 = scalar_lea.vmem [#allocation4], 87
    %v2412 = vld [vmem:[%s2411] ss:$8 sm:$0x3]
    %v2414 = vlaneseq
    %v2415 = vshrl.u32 %v2414, 7
    %v2416 = vsub.s32 0, %v2415
    %v2417 = vrot.slane %v2412, %v2416
    %v2418 = vlaneseq
    %v2419 = vshrl.u32 %v2418, 7
    %v2420 = vsub.s32 1, %v2419
    %v2421 = vrot.slane %v2412, %v2420
    %v2424 = vmul.f32 %v2409, %v2417
    %v2425 = vmul.f32 %v2410, %v2421
    %v2426 = vadd.f32 %v2380, %v2424
    %v2427 = vadd.f32 %v2381, %v2425
    %v2428 = vstv %s171
    %v2429 = vmul.f32 %v2428, %v95
    %v2430 = vmul.f32 %v2428, %v96
    %v2431 = vmul.f32 %v2428, %v97
    %v2432 = vmul.f32 %v2428, %v98
    %v2433 = vstv %s220
    %v2434 = vmul.f32 %v2433, %v104
    %v2435 = vmul.f32 %v2433, %v110
    %v2436 = vmul.f32 %v2433, %v116
    %v2437 = vmul.f32 %v2433, %v122
    %v2438 = vadd.f32 %v2429, %v2434
    %v2439 = vadd.f32 %v2430, %v2435
    %v2440 = vadd.f32 %v2431, %v2436
    %v2441 = vadd.f32 %v2432, %v2437
    %v2446 = vsel %vm239, %v2440, %v2438
    %v2447 = vsel %vm239, %v2441, %v2439
    %2450 = vrot.lane.b32.xlu0 %v2446, 77
    %v2451 = vpop.permute.xlu0 %2450
    %2452 = vrot.lane.b32.xlu0 %v2447, 77
    %v2453 = vpop.permute.xlu0 %2452
    %vm2454 = vcmp.lt.s32.totalorder %v249, 77
    %v2455 = vsel %vm2454, %v2451, %v2453
    %v2456 = vsel %vm2454, %v2453, %v2451
    %s2457 = scalar_lea.vmem [#allocation4], 96
    %v2458 = vld [vmem:[%s2457] ss:$8 sm:$0x3]
    %v2460 = vlaneseq
    %v2461 = vshrl.u32 %v2460, 7
    %v2462 = vsub.s32 0, %v2461
    %v2463 = vrot.slane %v2458, %v2462
    %v2464 = vlaneseq
    %v2465 = vshrl.u32 %v2464, 7
    %v2466 = vsub.s32 1, %v2465
    %v2467 = vrot.slane %v2458, %v2466
    %v2470 = vmul.f32 %v2455, %v2463
    %v2471 = vmul.f32 %v2456, %v2467
    %v2472 = vadd.f32 %v2426, %v2470
    %v2473 = vadd.f32 %v2427, %v2471
    %v2474 = vmax.f32 %v2472, 0.0
    %v2475 = vmax.f32 %v2473, 0.0
    %v2476 = vxor.u32 %v2474, 2147483648
    %v2477 = vxor.u32 %v2475, 2147483648
    %v2478 = vmul.f32 %v2476, 1.442695
    %v2479 = vpow.pop %v2478
    %v2480 = vmul.f32 %v2477, 1.442695
    %v2481 = vpow.pop %v2480
    %v2482 = vadd.f32 %v2479, 1.0
    %v2483 = vadd.f32 %v2481, 1.0
    %v2484 = vrcp.pop %v2482
    %v2485 = vmul.f32 1.0, %v2484
    %v2486 = vrcp.pop %v2483
    %v2487 = vmul.f32 1.0, %v2486
    %v2490 = vcombine.low %v2485, %v2487
    %v2492 = vunpack.c.l.s4 1966171168
    %v2493 = vunpack.c.0.s8 %v2492
    %v2494 = vlaneseq
    %v2495 = vshrl.u32 %v2494, 7
    %v2496 = vsub.s32 %v2493, %v2495
    %v2497 = vrot.slane %v2490, %v2496
    %v2498 = vcombine.high %v2497, %v2497
    %v2500 = vunpack.c.l.s4 1966171168
    %v2501 = vunpack.c.0.s8 %v2500
    %v2502 = vlaneseq
    %v2503 = vshrl.u32 %v2502, 7
    %v2504 = vsub.s32 %v2501, %v2503
    %v2505 = vrot.slane %v2497, %v2504
    %v2507 = vunpack.c.l.s4 1966171168
    %v2508 = vunpack.c.0.s8 %v2507
    %v2509 = vlaneseq
    %v2510 = vshrl.u32 %v2509, 7
    %v2511 = vsub.s32 %v2508, %v2510
    %v2512 = vrot.slane %v2498, %v2511
    %v2513 = vlaneseq
    %v2514 = vshrl.u32 %v2513, 7
    %v2515 = vsub.s32 0, %v2514
    %v2516 = vrot.slane %v2505, %v2515
    %v2517 = vlaneseq
    %v2518 = vshrl.u32 %v2517, 7
    %v2519 = vsub.s32 1, %v2518
    %v2520 = vrot.slane %v2505, %v2519
    %v2521 = vlaneseq
    %v2522 = vshrl.u32 %v2521, 7
    %v2523 = vsub.s32 0, %v2522
    %v2524 = vrot.slane %v2512, %v2523
    %v2525 = vlaneseq
    %v2526 = vshrl.u32 %v2525, 7
    %v2527 = vsub.s32 1, %v2526
    %v2528 = vrot.slane %v2512, %v2527
    %v2533 = vmul.f32 %v66, %v2516
    %v2534 = vmul.f32 %v67, %v2520
    %v2535 = vmul.f32 %v68, %v2524
    %v2536 = vmul.f32 %v69, %v2528
    %v2537 = vmax.f32 %v2533, 0.0
    %v2538 = vmax.f32 %v2534, 0.0
    %v2539 = vmax.f32 %v2535, 0.0
    %v2540 = vmax.f32 %v2536, 0.0
    %2541 = vst [vmem:[#allocation9] sm:$0xff] %v2537
    %2542 = vst [vmem:[#allocation9 + $0x8] sm:$0xff] %v2538
    %2543 = vst [vmem:[#allocation9 + $0x10] sm:$0xff] %v2539
    %2544 = vst [vmem:[#allocation9 + $0x18] sm:$0xff] %v2540
    // Predicated region
    $region22: #{tpu_custom_call.1} parent=1 // pred_check
      _
    $region23: #{tpu_custom_call.1} parent=1 // pred_check_branch
      %2546 = sbr.rel (0) target = $region25
    $region24: #{tpu_custom_call.1} parent=1 // pred_region
      %s2548 = ssub.s32 512, 512
      %2549 = vsyncadd [#allocation6], %s2548
      %s2550 = sshll.u32 [#allocation9], 4
      %s2551 = int_to_ptr.vmem [resolvable:$true] %s2550
      %2556 = dma.vmem_to_hbm [thread:$0]  %s2551, 512, %s4, [#allocation6], 256, 256, 16
    $region25: #{tpu_custom_call.1} parent=1 // pred_fallthru
      _
    // Predicated region
    $region26: #{tpu_custom_call.1} parent=1 // pred_check
      _
    $region27: #{tpu_custom_call.1} parent=1 // pred_check_branch
      %2558 = sbr.rel (0) target = $region29
    $region28: #{tpu_custom_call.1} parent=1 // pred_region
      %2559 = dma.done [#allocation6], 512
    $region29: #{tpu_custom_call.1} parent=1 // pred_fallthru
      _
    %2560 = vsyncpa [#allocation5], 1
    %2561 = vsyncpa [#allocation8], 1
    %2562 = vsyncpa [#allocation6], 1

</llo_original>
